<compile_context>
chip_gen: v6e
topology: v6e:2x2x1
jax: 0.10.0
libtpu: 0.0.40
codegen_flags: <defaults>
</compile_context>

<pallas_src>
import numpy as np
import jax
import jax.numpy as jnp
from jax.experimental import pallas as pl
from jax.experimental.pallas import tpu as pltpu

C = 64                 # channels (fixed by the module: in_channels=64, cfg['2'])
H = W = 14             # spatial size (fixed by Linear(64 * 14 * 14, 2))
HP, WP = H + 2, W + 2  # zero-padded grid
NP = HP * WP           # 256 flattened padded positions (lane dim, 2 x 128)
NUM_CLASSES = 2


# ----------------------------- fused Pallas kernel -------------------------

def fused_forward_kernel(mask_ref, scat_ref, x_ref, w1_ref, s1_ref, t1_ref,
                         w2_ref, s2_ref, t2_ref, wc_ref, bc_ref,
                         y_ref, out_ref):
    """One image end-to-end: pad -> (conv3x3+BN+ReLU) x2 -> padded NCHW features + logits.

    The feature map is kept in (C, NP) = (64, 256) flattened padded NCHW coordinates
    the whole time, so every piece of conv arithmetic is an MXU matmul plus cheap
    XLU lane rolls; nothing round-trips through HBM between layers.
    """
    interior = mask_ref[...]                                   # (1, NP) f32, 1 inside 14x14

    # ---- layer-1 zero padding as a single MXU matmul (exact 0/1 scatter) ----
    xpad = jnp.dot(x_ref[0].astype(jnp.bfloat16), scat_ref[...],
                   preferred_element_type=jnp.float32)         # (C, NP) f32, halo exactly 0

    def conv3x3_bn_relu(x_f32, w_ref, s_ref, t_ref):
        # x_f32: (C, NP) f32 with zero halo.  Column (+/-1) taps are folded into the
        # matmul K dimension via input-side rolls; row (+/-WP) taps are output-side
        # rolls.  Roll wrap-around only pollutes halo positions, which get masked.
        x3 = jnp.concatenate(
            [pltpu.roll(x_f32, shift=1, axis=1),               # [c,q] = x[c, q-1]
             x_f32,
             pltpu.roll(x_f32, shift=NP - 1, axis=1)],         # == shift -1: x[c, q+1]
            axis=0).astype(jnp.bfloat16)                       # (3C, NP) bf16
        z0 = jnp.dot(w_ref[0], x3, preferred_element_type=jnp.float32)   # ky = 0
        z1 = jnp.dot(w_ref[1], x3, preferred_element_type=jnp.float32)   # ky = 1
        z2 = jnp.dot(w_ref[2], x3, preferred_element_type=jnp.float32)   # ky = 2
        acc = (pltpu.roll(z0, shift=WP, axis=1)                # out[q] += z0[q - WP]
               + z1
               + pltpu.roll(z2, shift=NP - WP, axis=1))        # out[q] += z2[q + WP]
        # folded BN + ReLU (f32), then zero the halo ring: this IS the next layer's
        # zero padding and keeps stored y / classifier contraction clean.
        return jnp.maximum(acc * s_ref[...] + t_ref[...], 0.0) * interior

    h1 = conv3x3_bn_relu(xpad, w1_ref, s1_ref, t1_ref)         # (C, NP) f32
    h2 = conv3x3_bn_relu(h1, w2_ref, s2_ref, t2_ref)           # (C, NP) f32

    # full padded block store: aligned, lane-dense (256 = 2x128); wrapper slices interior
    y_ref[0] = h2.astype(y_ref.dtype)

    # classifier: weights are pre-scattered to padded coordinates with zeroed halo,
    # so the resident (64, 256) map contracts directly.  Lane reduction on the MXU
    # (ones-dot), tiny sublane reduce afterwards.
    ones_q = jnp.ones((NP, 1), jnp.float32)
    o0 = jnp.sum(jnp.dot(h2 * wc_ref[0], ones_q, preferred_element_type=jnp.float32))
    o1 = jnp.sum(jnp.dot(h2 * wc_ref[1], ones_q, preferred_element_type=jnp.float32))
    cls = jax.lax.broadcasted_iota(jnp.int32, (1, NUM_CLASSES), 1)
    out_ref[0] = (jnp.where(cls == 0, o0, o1) + bc_ref[...]).astype(out_ref.dtype)


# ----------------------------- wrapper --------------------------------------

def model_forward(kparams, x_nchw):
    """Eval-mode forward of model(size='2'): returns (y_nchw, logits)."""
    B = x_nchw.shape[0]
    x_flat = x_nchw.reshape(B, C, H * W).astype(jnp.float32)   # free reshape, NCHW-native

    y_pad, logits3 = pl.pallas_call(
        fused_forward_kernel,
        out_shape=(
            jax.ShapeDtypeStruct((B, C, NP), jnp.float32),     # padded feature map
            jax.ShapeDtypeStruct((B, 1, NUM_CLASSES), jnp.float32),
        ),
        grid=(B,),
        in_specs=[
            pl.BlockSpec((1, NP), lambda b: (0, 0)),                   # interior mask
            pl.BlockSpec((H * W, NP), lambda b: (0, 0)),               # pad-scatter (bf16)
            pl.BlockSpec((1, C, H * W), lambda b: (b, 0, 0)),          # x, one image
            pl.BlockSpec((3, C, 3 * C), lambda b: (0, 0, 0)),          # conv1 row taps (bf16)
            pl.BlockSpec((C, 1), lambda b: (0, 0)),                    # bn1 scale
            pl.BlockSpec((C, 1), lambda b: (0, 0)),                    # bn1 shift
            pl.BlockSpec((3, C, 3 * C), lambda b: (0, 0, 0)),          # conv2 row taps (bf16)
            pl.BlockSpec((C, 1), lambda b: (0, 0)),                    # bn2 scale
            pl.BlockSpec((C, 1), lambda b: (0, 0)),                    # bn2 shift
            pl.BlockSpec((NUM_CLASSES, C, NP), lambda b: (0, 0, 0)),   # classifier W (padded)
            pl.BlockSpec((1, NUM_CLASSES), lambda b: (0, 0)),          # classifier b
        ],
        out_specs=(
            pl.BlockSpec((1, C, NP), lambda b: (b, 0, 0)),             # y (padded NCHW)
            pl.BlockSpec((1, 1, NUM_CLASSES), lambda b: (b, 0, 0)),    # logits
        ),
        compiler_params=pltpu.CompilerParams(dimension_semantics=("parallel",)),
    )(kparams["mask"], kparams["scat"], x_flat,
      kparams["w1"], kparams["s1"], kparams["t1"],
      kparams["w2"], kparams["s2"], kparams["t2"],
      kparams["wc"], kparams["bc"])

    # interior slice (cheap, fusable); no transpose needed: layout is NCHW-native
    y_nchw = y_pad.reshape(B, C, HP, WP)[:, :, 1:1 + H, 1:1 + W]
    return y_nchw, logits3[:, 0, :]


# ----------------------------- parameter handling ---------------------------

def fold_bn(conv_bias, gamma, beta, mean, var, eps=1e-5):
    # eval-mode BatchNorm folded into a per-channel scale/shift after the conv
    scale = gamma / jnp.sqrt(var + eps)
    shift = beta + (conv_bias - mean) * scale
    return scale, shift


def make_params(key):
    """Random parameters in PyTorch layouts (Conv2d OIHW, Linear (out, in))."""
    ks = jax.random.split(key, 16)
    p = {}
    p["w1"] = 0.05 * jax.random.normal(ks[0], (C, C, 3, 3), jnp.float32)
    p["b1"] = 0.01 * jax.random.normal(ks[1], (C,), jnp.float32)
    p["g1"] = 1.0 + 0.1 * jax.random.normal(ks[2], (C,), jnp.float32)
    p["beta1"] = 0.1 * jax.random.normal(ks[3], (C,), jnp.float32)
    p["m1"] = 0.1 * jax.random.normal(ks[4], (C,), jnp.float32)
    p["v1"] = 1.0 + 0.5 * jax.random.uniform(ks[5], (C,), jnp.float32)
    p["w2"] = 0.05 * jax.random.normal(ks[6], (C, C, 3, 3), jnp.float32)
    p["b2"] = 0.01 * jax.random.normal(ks[7], (C,), jnp.float32)
    p["g2"] = 1.0 + 0.1 * jax.random.normal(ks[8], (C,), jnp.float32)
    p["beta2"] = 0.1 * jax.random.normal(ks[9], (C,), jnp.float32)
    p["m2"] = 0.1 * jax.random.normal(ks[10], (C,), jnp.float32)
    p["v2"] = 1.0 + 0.5 * jax.random.uniform(ks[11], (C,), jnp.float32)
    p["wc"] = 0.01 * jax.random.normal(ks[12], (NUM_CLASSES, C * H * W), jnp.float32)
    p["bc"] = 0.01 * jax.random.normal(ks[13], (NUM_CLASSES,), jnp.float32)
    return p


def build_kernel_params(p, eps=1e-5):
    """One-time repack of PyTorch-layout parameters into kernel-friendly layouts."""
    def conv_row_taps(w_oihw):
        # OIHW -> per-ky weight block W[ky][o, kx*C + c] = w[o, c, ky, kx], bf16.
        rows = [jnp.transpose(w_oihw[:, :, ky, :], (0, 2, 1)).reshape(C, 3 * C)
                for ky in range(3)]
        return jnp.stack(rows, axis=0).astype(jnp.bfloat16)     # (3, C, 3C)

    s1, t1 = fold_bn(p["b1"], p["g1"], p["beta1"], p["m1"], p["v1"], eps)
    s2, t2 = fold_bn(p["b2"], p["g2"], p["beta2"], p["m2"], p["v2"], eps)

    # Linear weight (O, C*H*W) is laid out for an NCHW flatten; scatter it into the
    # kernel's padded NCHW coordinates with a zeroed halo ring.
    wc_chw = p["wc"].reshape(NUM_CLASSES, C, H, W)
    wc_pad = jnp.zeros((NUM_CLASSES, C, HP, WP), jnp.float32)
    wc_pad = wc_pad.at[:, :, 1:1 + H, 1:1 + W].set(wc_chw)

    # pad-scatter matrix: flat unpadded p = i*W + j  ->  padded q = (i+1)*WP + (j+1)
    p_idx = np.arange(H * W)
    q_idx = (p_idx // W + 1) * WP + (p_idx % W + 1)
    scat = np.zeros((H * W, NP), np.float32)
    scat[p_idx, q_idx] = 1.0

    # interior mask over flattened padded positions
    q = np.arange(NP)
    interior = ((q // WP >= 1) & (q // WP <= H) & (q % WP >= 1) & (q % WP <= W))
    mask = interior.astype(np.float32).reshape(1, NP)

    return {
        "w1": conv_row_taps(p["w1"]), "s1": s1.reshape(C, 1), "t1": t1.reshape(C, 1),
        "w2": conv_row_taps(p["w2"]), "s2": s2.reshape(C, 1), "t2": t2.reshape(C, 1),
        "wc": wc_pad.reshape(NUM_CLASSES, C, NP),
        "bc": p["bc"].reshape(1, NUM_CLASSES),
        "scat": jnp.asarray(scat, jnp.bfloat16),   # 0/1 entries are exact in bf16
        "mask": jnp.asarray(mask, jnp.float32),
    }


# ----------------------------- pure-XLA reference ---------------------------

def reference_forward(p, x_nchw, eps=1e-5):
    """Pure-XLA replica of the PyTorch module (eval mode), used as a numerics check."""
    def conv_bn_relu(x, w, b, g, beta, m, v):
        z = jax.lax.conv_general_dilated(
            x, w, window_strides=(1, 1), padding=((1, 1), (1, 1)),
            dimension_numbers=("NCHW", "OIHW", "NCHW"))
        z = z + b.reshape(1, -1, 1, 1)
        z = (z - m.reshape(1, -1, 1, 1)) / jnp.sqrt(v.reshape(1, -1, 1, 1) + eps)
        z = z * g.reshape(1, -1, 1, 1) + beta.reshape(1, -1, 1, 1)
        return jnp.maximum(z, 0.0)

    y = conv_bn_relu(x_nchw, p["w1"], p["b1"], p["g1"], p["beta1"], p["m1"], p["v1"])
    y = conv_bn_relu(y, p["w2"], p["b2"], p["g2"], p["beta2"], p["m2"], p["v2"])
    # Dropout (eval) and AvgPool2d(1,1) are identities.
    flat = y.reshape(y.shape[0], -1)
    out = flat @ p["wc"].T + p["bc"]
    return y, out


# ----------------------------- main ------------------------------------------

if __name__ == "__main__":
    key = jax.random.PRNGKey(0)
    k_x, k_p = jax.random.split(key)

    B = 2
    x = jax.random.normal(k_x, (B, C, H, W), jnp.float32)   # NCHW, like PyTorch
    params = make_params(k_p)
    kparams = build_kernel_params(params)                   # one-time repack

    fwd = jax.jit(model_forward)
    y, out = fwd(kparams, x)
    jax.block_until_ready((y, out))

    assert y.shape == (B, C, H, W), y.shape
    assert out.shape == (B, NUM_CLASSES), out.shape

    # numerical check against the pure-XLA replica of the PyTorch module
    y_ref, out_ref = reference_forward(params, x)
    np.testing.assert_allclose(np.asarray(y), np.asarray(y_ref), rtol=5e-2, atol=5e-2)
    np.testing.assert_allclose(np.asarray(out), np.asarray(out_ref), rtol=5e-2, atol=5e-2)

    print("KERNEL_OK")
</pallas_src>

<mosaic_0001>
module attributes {stable_mosaic.version = 11 : i64} {
  func.func @fused_forward_kernel(%arg0: i32, %arg1: memref<1x256xf32, #tpu.memory_space<vmem>>, %arg2: memref<196x256xbf16, #tpu.memory_space<vmem>>, %arg3: memref<1x64x196xf32, #tpu.memory_space<vmem>>, %arg4: memref<3x64x192xbf16, #tpu.memory_space<vmem>>, %arg5: memref<64x1xf32, #tpu.memory_space<vmem>>, %arg6: memref<64x1xf32, #tpu.memory_space<vmem>>, %arg7: memref<3x64x192xbf16, #tpu.memory_space<vmem>>, %arg8: memref<64x1xf32, #tpu.memory_space<vmem>>, %arg9: memref<64x1xf32, #tpu.memory_space<vmem>>, %arg10: memref<2x64x256xf32, #tpu.memory_space<vmem>>, %arg11: memref<1x2xf32, #tpu.memory_space<vmem>>, %arg12: memref<1x64x256xf32, #tpu.memory_space<vmem>>, %arg13: memref<1x1x2xf32, #tpu.memory_space<vmem>>) attributes {dimension_semantics = [#tpu.dimension_semantics<parallel>], iteration_bounds = array<i64: 2>, scalar_prefetch = 0 : i64, scratch_operands = 0 : i64, tpu.core_type = #tpu.core_type<tc>, window_params = [{pipeline_mode = #tpu.pipeline_mode<synchronous>, transform_indices = @transform_0, window_bounds = array<i64: 1, 256>}, {pipeline_mode = #tpu.pipeline_mode<synchronous>, transform_indices = @transform_1, window_bounds = array<i64: 196, 256>}, {transform_indices = @transform_2, window_bounds = array<i64: 1, 64, 196>}, {pipeline_mode = #tpu.pipeline_mode<synchronous>, transform_indices = @transform_3, window_bounds = array<i64: 3, 64, 192>}, {pipeline_mode = #tpu.pipeline_mode<synchronous>, transform_indices = @transform_4, window_bounds = array<i64: 64, 1>}, {pipeline_mode = #tpu.pipeline_mode<synchronous>, transform_indices = @transform_5, window_bounds = array<i64: 64, 1>}, {pipeline_mode = #tpu.pipeline_mode<synchronous>, transform_indices = @transform_6, window_bounds = array<i64: 3, 64, 192>}, {pipeline_mode = #tpu.pipeline_mode<synchronous>, transform_indices = @transform_7, window_bounds = array<i64: 64, 1>}, {pipeline_mode = #tpu.pipeline_mode<synchronous>, transform_indices = @transform_8, window_bounds = array<i64: 64, 1>}, {pipeline_mode = #tpu.pipeline_mode<synchronous>, transform_indices = @transform_9, window_bounds = array<i64: 2, 64, 256>}, {pipeline_mode = #tpu.pipeline_mode<synchronous>, transform_indices = @transform_10, window_bounds = array<i64: 1, 2>}, {transform_indices = @transform_11, window_bounds = array<i64: 1, 64, 256>}, {transform_indices = @transform_12, window_bounds = array<i64: 1, 1, 2>}]} {
    %c0 = arith.constant 0 : index
    %c0_0 = arith.constant 0 : index
    %0 = vector.load %arg1[%c0, %c0_0] : memref<1x256xf32, #tpu.memory_space<vmem>>, vector<1x256xf32>
    %c0_1 = arith.constant 0 : index
    %c0_2 = arith.constant 0 : index
    %c0_3 = arith.constant 0 : index
    %1 = vector.load %arg3[%c0_1, %c0_2, %c0_3] : memref<1x64x196xf32, #tpu.memory_space<vmem>>, vector<1x64x196xf32>
    %2 = vector.shape_cast %1 : vector<1x64x196xf32> to vector<64x196xf32>
    %3 = arith.truncf %2 : vector<64x196xf32> to vector<64x196xbf16>
    %c0_4 = arith.constant 0 : index
    %c0_5 = arith.constant 0 : index
    %4 = vector.load %arg2[%c0_4, %c0_5] : memref<196x256xbf16, #tpu.memory_space<vmem>>, vector<196x256xbf16>
    %cst = arith.constant dense<0.000000e+00> : vector<64x256xf32>
    %5 = tpu.matmul %3, %4, %cst {dimension_numbers = #tpu.dot_dimension_numbers<[1], [0], [0], [1], [0, 0, 1, 1], [], []>} : vector<64x196xbf16>, vector<196x256xbf16>, vector<64x256xf32> -> vector<64x256xf32>
    %c1_i32 = arith.constant 1 : i32
    %6 = tpu.dynamic_rotate %5 by %c1_i32 dim 1 : vector<64x256xf32>, i32 -> vector<64x256xf32>
    %c255_i32 = arith.constant 255 : i32
    %7 = tpu.dynamic_rotate %5 by %c255_i32 dim 1 : vector<64x256xf32>, i32 -> vector<64x256xf32>
    %8 = tpu.concatenate %6, %5, %7 in 0 : vector<64x256xf32>, vector<64x256xf32>, vector<64x256xf32> -> vector<192x256xf32>
    %9 = arith.truncf %8 : vector<192x256xf32> to vector<192x256xbf16>
    %c0_6 = arith.constant 0 : index
    %c0_7 = arith.constant 0 : index
    %c0_8 = arith.constant 0 : index
    %10 = vector.load %arg4[%c0_6, %c0_7, %c0_8] : memref<3x64x192xbf16, #tpu.memory_space<vmem>>, vector<1x64x192xbf16>
    %11 = vector.shape_cast %10 : vector<1x64x192xbf16> to vector<64x192xbf16>
    %cst_9 = arith.constant dense<0.000000e+00> : vector<64x256xf32>
    %12 = tpu.matmul %11, %9, %cst_9 {dimension_numbers = #tpu.dot_dimension_numbers<[1], [0], [0], [1], [0, 0, 1, 1], [], []>} : vector<64x192xbf16>, vector<192x256xbf16>, vector<64x256xf32> -> vector<64x256xf32>
    %c1 = arith.constant 1 : index
    %c0_10 = arith.constant 0 : index
    %c0_11 = arith.constant 0 : index
    %13 = vector.load %arg4[%c1, %c0_10, %c0_11] : memref<3x64x192xbf16, #tpu.memory_space<vmem>>, vector<1x64x192xbf16>
    %14 = vector.shape_cast %13 : vector<1x64x192xbf16> to vector<64x192xbf16>
    %cst_12 = arith.constant dense<0.000000e+00> : vector<64x256xf32>
    %15 = tpu.matmul %14, %9, %cst_12 {dimension_numbers = #tpu.dot_dimension_numbers<[1], [0], [0], [1], [0, 0, 1, 1], [], []>} : vector<64x192xbf16>, vector<192x256xbf16>, vector<64x256xf32> -> vector<64x256xf32>
    %c2 = arith.constant 2 : index
    %c0_13 = arith.constant 0 : index
    %c0_14 = arith.constant 0 : index
    %16 = vector.load %arg4[%c2, %c0_13, %c0_14] : memref<3x64x192xbf16, #tpu.memory_space<vmem>>, vector<1x64x192xbf16>
    %17 = vector.shape_cast %16 : vector<1x64x192xbf16> to vector<64x192xbf16>
    %cst_15 = arith.constant dense<0.000000e+00> : vector<64x256xf32>
    %18 = tpu.matmul %17, %9, %cst_15 {dimension_numbers = #tpu.dot_dimension_numbers<[1], [0], [0], [1], [0, 0, 1, 1], [], []>} : vector<64x192xbf16>, vector<192x256xbf16>, vector<64x256xf32> -> vector<64x256xf32>
    %c16_i32 = arith.constant 16 : i32
    %19 = tpu.dynamic_rotate %12 by %c16_i32 dim 1 : vector<64x256xf32>, i32 -> vector<64x256xf32>
    %20 = arith.addf %19, %15 : vector<64x256xf32>
    %c240_i32 = arith.constant 240 : i32
    %21 = tpu.dynamic_rotate %18 by %c240_i32 dim 1 : vector<64x256xf32>, i32 -> vector<64x256xf32>
    %22 = arith.addf %20, %21 : vector<64x256xf32>
    %c0_16 = arith.constant 0 : index
    %c0_17 = arith.constant 0 : index
    %23 = vector.load %arg5[%c0_16, %c0_17] : memref<64x1xf32, #tpu.memory_space<vmem>>, vector<64x1xf32>
    %24 = vector.broadcast %23 : vector<64x1xf32> to vector<64x256xf32>
    %25 = arith.mulf %22, %24 : vector<64x256xf32>
    %c0_18 = arith.constant 0 : index
    %c0_19 = arith.constant 0 : index
    %26 = vector.load %arg6[%c0_18, %c0_19] : memref<64x1xf32, #tpu.memory_space<vmem>>, vector<64x1xf32>
    %27 = vector.broadcast %26 : vector<64x1xf32> to vector<64x256xf32>
    %28 = arith.addf %25, %27 : vector<64x256xf32>
    %cst_20 = arith.constant 0.000000e+00 : f32
    %29 = vector.broadcast %cst_20 : f32 to vector<64x256xf32>
    %30 = arith.maximumf %28, %29 : vector<64x256xf32>
    %31 = vector.broadcast %0 : vector<1x256xf32> to vector<64x256xf32>
    %32 = arith.mulf %30, %31 : vector<64x256xf32>
    %c1_i32_21 = arith.constant 1 : i32
    %33 = tpu.dynamic_rotate %32 by %c1_i32_21 dim 1 : vector<64x256xf32>, i32 -> vector<64x256xf32>
    %c255_i32_22 = arith.constant 255 : i32
    %34 = tpu.dynamic_rotate %32 by %c255_i32_22 dim 1 : vector<64x256xf32>, i32 -> vector<64x256xf32>
    %35 = tpu.concatenate %33, %32, %34 in 0 : vector<64x256xf32>, vector<64x256xf32>, vector<64x256xf32> -> vector<192x256xf32>
    %36 = arith.truncf %35 : vector<192x256xf32> to vector<192x256xbf16>
    %c0_23 = arith.constant 0 : index
    %c0_24 = arith.constant 0 : index
    %c0_25 = arith.constant 0 : index
    %37 = vector.load %arg7[%c0_23, %c0_24, %c0_25] : memref<3x64x192xbf16, #tpu.memory_space<vmem>>, vector<1x64x192xbf16>
    %38 = vector.shape_cast %37 : vector<1x64x192xbf16> to vector<64x192xbf16>
    %cst_26 = arith.constant dense<0.000000e+00> : vector<64x256xf32>
    %39 = tpu.matmul %38, %36, %cst_26 {dimension_numbers = #tpu.dot_dimension_numbers<[1], [0], [0], [1], [0, 0, 1, 1], [], []>} : vector<64x192xbf16>, vector<192x256xbf16>, vector<64x256xf32> -> vector<64x256xf32>
    %c1_27 = arith.constant 1 : index
    %c0_28 = arith.constant 0 : index
    %c0_29 = arith.constant 0 : index
    %40 = vector.load %arg7[%c1_27, %c0_28, %c0_29] : memref<3x64x192xbf16, #tpu.memory_space<vmem>>, vector<1x64x192xbf16>
    %41 = vector.shape_cast %40 : vector<1x64x192xbf16> to vector<64x192xbf16>
    %cst_30 = arith.constant dense<0.000000e+00> : vector<64x256xf32>
    %42 = tpu.matmul %41, %36, %cst_30 {dimension_numbers = #tpu.dot_dimension_numbers<[1], [0], [0], [1], [0, 0, 1, 1], [], []>} : vector<64x192xbf16>, vector<192x256xbf16>, vector<64x256xf32> -> vector<64x256xf32>
    %c2_31 = arith.constant 2 : index
    %c0_32 = arith.constant 0 : index
    %c0_33 = arith.constant 0 : index
    %43 = vector.load %arg7[%c2_31, %c0_32, %c0_33] : memref<3x64x192xbf16, #tpu.memory_space<vmem>>, vector<1x64x192xbf16>
    %44 = vector.shape_cast %43 : vector<1x64x192xbf16> to vector<64x192xbf16>
    %cst_34 = arith.constant dense<0.000000e+00> : vector<64x256xf32>
    %45 = tpu.matmul %44, %36, %cst_34 {dimension_numbers = #tpu.dot_dimension_numbers<[1], [0], [0], [1], [0, 0, 1, 1], [], []>} : vector<64x192xbf16>, vector<192x256xbf16>, vector<64x256xf32> -> vector<64x256xf32>
    %c16_i32_35 = arith.constant 16 : i32
    %46 = tpu.dynamic_rotate %39 by %c16_i32_35 dim 1 : vector<64x256xf32>, i32 -> vector<64x256xf32>
    %47 = arith.addf %46, %42 : vector<64x256xf32>
    %c240_i32_36 = arith.constant 240 : i32
    %48 = tpu.dynamic_rotate %45 by %c240_i32_36 dim 1 : vector<64x256xf32>, i32 -> vector<64x256xf32>
    %49 = arith.addf %47, %48 : vector<64x256xf32>
    %c0_37 = arith.constant 0 : index
    %c0_38 = arith.constant 0 : index
    %50 = vector.load %arg8[%c0_37, %c0_38] : memref<64x1xf32, #tpu.memory_space<vmem>>, vector<64x1xf32>
    %51 = vector.broadcast %50 : vector<64x1xf32> to vector<64x256xf32>
    %52 = arith.mulf %49, %51 : vector<64x256xf32>
    %c0_39 = arith.constant 0 : index
    %c0_40 = arith.constant 0 : index
    %53 = vector.load %arg9[%c0_39, %c0_40] : memref<64x1xf32, #tpu.memory_space<vmem>>, vector<64x1xf32>
    %54 = vector.broadcast %53 : vector<64x1xf32> to vector<64x256xf32>
    %55 = arith.addf %52, %54 : vector<64x256xf32>
    %cst_41 = arith.constant 0.000000e+00 : f32
    %56 = vector.broadcast %cst_41 : f32 to vector<64x256xf32>
    %57 = arith.maximumf %55, %56 : vector<64x256xf32>
    %58 = vector.broadcast %0 : vector<1x256xf32> to vector<64x256xf32>
    %59 = arith.mulf %57, %58 : vector<64x256xf32>
    %c0_42 = arith.constant 0 : index
    %c0_43 = arith.constant 0 : index
    %c0_44 = arith.constant 0 : index
    %60 = vector.load %arg12[%c0_42, %c0_43, %c0_44] : memref<1x64x256xf32, #tpu.memory_space<vmem>>, vector<1x64x256xf32>
    %61 = vector.shape_cast %60 : vector<1x64x256xf32> to vector<64x256xf32>
    %62 = vector.shape_cast %59 : vector<64x256xf32> to vector<1x64x256xf32>
    tpu.vector_store %arg12[%c0_42, %c0_43, %c0_44], %62 {strides = array<i32>} : memref<1x64x256xf32, #tpu.memory_space<vmem>>, vector<1x64x256xf32>,
    %cst_45 = arith.constant 1.000000e+00 : f32
    %63 = vector.broadcast %cst_45 : f32 to vector<256x1xf32>
    %c0_46 = arith.constant 0 : index
    %c0_47 = arith.constant 0 : index
    %c0_48 = arith.constant 0 : index
    %64 = vector.load %arg10[%c0_46, %c0_47, %c0_48] : memref<2x64x256xf32, #tpu.memory_space<vmem>>, vector<1x64x256xf32>
    %65 = vector.shape_cast %64 : vector<1x64x256xf32> to vector<64x256xf32>
    %66 = arith.mulf %59, %65 : vector<64x256xf32>
    %cst_49 = arith.constant dense<0.000000e+00> : vector<64x1xf32>
    %67 = tpu.matmul %66, %63, %cst_49 {dimension_numbers = #tpu.dot_dimension_numbers<[1], [0], [0], [1], [0, 0, 1, 1], [], []>} : vector<64x256xf32>, vector<256x1xf32>, vector<64x1xf32> -> vector<64x1xf32>
    %68 = vector.shape_cast %67 : vector<64x1xf32> to vector<1x64x1xf32>
    %cst_50 = arith.constant dense<0.000000e+00> : vector<1xf32>
    %69 = vector.multi_reduction <add>, %68, %cst_50 [1, 2] : vector<1x64x1xf32> to vector<1xf32>
    %70 = vector.shape_cast %69 : vector<1xf32> to vector<1x1x1xf32>
    %71 = vector.extract %70[0, 0, 0] : f32 from vector<1x1x1xf32>
    %c1_51 = arith.constant 1 : index
    %c0_52 = arith.constant 0 : index
    %c0_53 = arith.constant 0 : index
    %72 = vector.load %arg10[%c1_51, %c0_52, %c0_53] : memref<2x64x256xf32, #tpu.memory_space<vmem>>, vector<1x64x256xf32>
    %73 = vector.shape_cast %72 : vector<1x64x256xf32> to vector<64x256xf32>
    %74 = arith.mulf %59, %73 : vector<64x256xf32>
    %cst_54 = arith.constant dense<0.000000e+00> : vector<64x1xf32>
    %75 = tpu.matmul %74, %63, %cst_54 {dimension_numbers = #tpu.dot_dimension_numbers<[1], [0], [0], [1], [0, 0, 1, 1], [], []>} : vector<64x256xf32>, vector<256x1xf32>, vector<64x1xf32> -> vector<64x1xf32>
    %76 = vector.shape_cast %75 : vector<64x1xf32> to vector<1x64x1xf32>
    %cst_55 = arith.constant dense<0.000000e+00> : vector<1xf32>
    %77 = vector.multi_reduction <add>, %76, %cst_55 [1, 2] : vector<1x64x1xf32> to vector<1xf32>
    %78 = vector.shape_cast %77 : vector<1xf32> to vector<1x1x1xf32>
    %79 = vector.extract %78[0, 0, 0] : f32 from vector<1x1x1xf32>
    %80 = tpu.iota {dimensions = array<i32: 1>} : vector<1x2xi32>
    %c0_i32 = arith.constant 0 : i32
    %81 = vector.broadcast %c0_i32 : i32 to vector<1x2xi32>
    %82 = arith.cmpi eq, %80, %81 : vector<1x2xi32>
    %83 = vector.broadcast %71 : f32 to vector<1x2xf32>
    %84 = vector.broadcast %79 : f32 to vector<1x2xf32>
    %85 = arith.select %82, %83, %84 : vector<1x2xi1>, vector<1x2xf32>
    %c0_56 = arith.constant 0 : index
    %c0_57 = arith.constant 0 : index
    %86 = vector.load %arg11[%c0_56, %c0_57] : memref<1x2xf32, #tpu.memory_space<vmem>>, vector<1x2xf32>
    %87 = arith.addf %85, %86 : vector<1x2xf32>
    %c0_58 = arith.constant 0 : index
    %c0_59 = arith.constant 0 : index
    %c0_60 = arith.constant 0 : index
    %88 = vector.load %arg13[%c0_58, %c0_59, %c0_60] : memref<1x1x2xf32, #tpu.memory_space<vmem>>, vector<1x1x2xf32>
    %89 = vector.shape_cast %88 : vector<1x1x2xf32> to vector<1x2xf32>
    %90 = vector.shape_cast %87 : vector<1x2xf32> to vector<1x1x2xf32>
    tpu.vector_store %arg13[%c0_58, %c0_59, %c0_60], %90 {strides = array<i32>} : memref<1x1x2xf32, #tpu.memory_space<vmem>>, vector<1x1x2xf32>,
    return
  }
  func.func @transform_0(%arg0: i32) -> (i32, i32) {
    %c0_i32 = arith.constant 0 : i32
    %c0_i32_0 = arith.constant 0 : i32
    %c0_i32_1 = arith.constant 0 : i32
    return %c0_i32, %c0_i32_0 : i32, i32
  }
  func.func @transform_1(%arg0: i32) -> (i32, i32) {
    %c0_i32 = arith.constant 0 : i32
    %c0_i32_0 = arith.constant 0 : i32
    %c0_i32_1 = arith.constant 0 : i32
    return %c0_i32, %c0_i32_0 : i32, i32
  }
  func.func @transform_2(%arg0: i32) -> (i32, i32, i32) {
    %c0_i32 = arith.constant 0 : i32
    %c0_i32_0 = arith.constant 0 : i32
    %c0_i32_1 = arith.constant 0 : i32
    return %arg0, %c0_i32, %c0_i32_0 : i32, i32, i32
  }
  func.func @transform_3(%arg0: i32) -> (i32, i32, i32) {
    %c0_i32 = arith.constant 0 : i32
    %c0_i32_0 = arith.constant 0 : i32
    %c0_i32_1 = arith.constant 0 : i32
    %c0_i32_2 = arith.constant 0 : i32
    return %c0_i32, %c0_i32_0, %c0_i32_1 : i32, i32, i32
  }
  func.func @transform_4(%arg0: i32) -> (i32, i32) {
    %c0_i32 = arith.constant 0 : i32
    %c0_i32_0 = arith.constant 0 : i32
    %c0_i32_1 = arith.constant 0 : i32
    return %c0_i32, %c0_i32_0 : i32, i32
  }
  func.func @transform_5(%arg0: i32) -> (i32, i32) {
    %c0_i32 = arith.constant 0 : i32
    %c0_i32_0 = arith.constant 0 : i32
    %c0_i32_1 = arith.constant 0 : i32
    return %c0_i32, %c0_i32_0 : i32, i32
  }
  func.func @transform_6(%arg0: i32) -> (i32, i32, i32) {
    %c0_i32 = arith.constant 0 : i32
    %c0_i32_0 = arith.constant 0 : i32
    %c0_i32_1 = arith.constant 0 : i32
    %c0_i32_2 = arith.constant 0 : i32
    return %c0_i32, %c0_i32_0, %c0_i32_1 : i32, i32, i32
  }
  func.func @transform_7(%arg0: i32) -> (i32, i32) {
    %c0_i32 = arith.constant 0 : i32
    %c0_i32_0 = arith.constant 0 : i32
    %c0_i32_1 = arith.constant 0 : i32
    return %c0_i32, %c0_i32_0 : i32, i32
  }
  func.func @transform_8(%arg0: i32) -> (i32, i32) {
    %c0_i32 = arith.constant 0 : i32
    %c0_i32_0 = arith.constant 0 : i32
    %c0_i32_1 = arith.constant 0 : i32
    return %c0_i32, %c0_i32_0 : i32, i32
  }
  func.func @transform_9(%arg0: i32) -> (i32, i32, i32) {
    %c0_i32 = arith.constant 0 : i32
    %c0_i32_0 = arith.constant 0 : i32
    %c0_i32_1 = arith.constant 0 : i32
    %c0_i32_2 = arith.constant 0 : i32
    return %c0_i32, %c0_i32_0, %c0_i32_1 : i32, i32, i32
  }
  func.func @transform_10(%arg0: i32) -> (i32, i32) {
    %c0_i32 = arith.constant 0 : i32
    %c0_i32_0 = arith.constant 0 : i32
    %c0_i32_1 = arith.constant 0 : i32
    return %c0_i32, %c0_i32_0 : i32, i32
  }
  func.func @transform_11(%arg0: i32) -> (i32, i32, i32) {
    %c0_i32 = arith.constant 0 : i32
    %c0_i32_0 = arith.constant 0 : i32
    %c0_i32_1 = arith.constant 0 : i32
    return %arg0, %c0_i32, %c0_i32_0 : i32, i32, i32
  }
  func.func @transform_12(%arg0: i32) -> (i32, i32, i32) {
    %c0_i32 = arith.constant 0 : i32
    %c0_i32_0 = arith.constant 0 : i32
    %c0_i32_1 = arith.constant 0 : i32
    return %arg0, %c0_i32, %c0_i32_0 : i32, i32, i32
  }
}

</mosaic_0001>

<llo_original>
// kernel: model_forward.1
$region0: #{model_forward.1}
  #allocation0 [shape = 'u32[]', space=smem, size = 0x4, offset = 0x4, fixed_abs, tag = 'smem constant byte address 0x4 - core index']
  #allocation1 [shape = 'u32[144,128]{1,0:T(1,128)}', space=vmem, size = 0x12000, scoped, tag = 'internal scratch']
  %s0 = inlined_call_operand.vmem [shape: f32[1,256], index: 0, kind: input, shape index: {}]
  %s1 = inlined_call_operand.vmem [shape: bf16[196,256], index: 1, kind: input, shape index: {}]
  %s2 = inlined_call_operand.vmem [shape: f32[2,64,196], index: 2, kind: input, shape index: {}]
  %s3 = inlined_call_operand.vmem [shape: bf16[3,64,192], index: 3, kind: input, shape index: {}]
  %s4 = inlined_call_operand.vmem [shape: f32[64,1], index: 4, kind: input, shape index: {}]
  %s5 = inlined_call_operand.vmem [shape: f32[64,1], index: 5, kind: input, shape index: {}]
  %s6 = inlined_call_operand.vmem [shape: bf16[3,64,192], index: 6, kind: input, shape index: {}]
  %s7 = inlined_call_operand.vmem [shape: f32[64,1], index: 7, kind: input, shape index: {}]
  %s8 = inlined_call_operand.vmem [shape: f32[64,1], index: 8, kind: input, shape index: {}]
  %s9 = inlined_call_operand.vmem [shape: f32[2,64,256], index: 9, kind: input, shape index: {}]
  %s10 = inlined_call_operand.vmem [shape: f32[1,2], index: 10, kind: input, shape index: {}]
  %s11 = inlined_call_operand.vmem [shape: f32[2,64,256], index: 11, kind: output, shape index: {0}]
  %s12 = inlined_call_operand.hbm [shape: f32[2,1,2], index: 12, kind: output, shape index: {1}]
  %13 = xla_tuple %s11, %s12
  %s14 = sld [smem:[#allocation0]]
  $region85: #{model_forward.1} parent=0
    _
  %s16 = ssub.s32 1, %s14
  %s17 = scalar_select 0, %s16, %s14
  $region1: #{model_forward.1} parent=0
    #allocation2 [shape = 'u8[1024]{0}', space=vmem, size = 0x400, scoped, tag = 'output window, operand 1']
    #allocation3 [shape = 's32[2]{0}', space=sflag, size = 0x8, scoped, tag = 'scoped memory for model_forward.1']
    %18 = vsyncpa [#allocation3], 0
    %s19 = scalar_lea.sflag [#allocation3], 1
    %20 = vsyncpa %s19, 0
    loop: start=0, step=1, limit=4
    $region2: #{model_forward.1} parent=1 // loop_pre_header
      _
    $region3: #{model_forward.1} parent=1 // loop_header
      %s22 = sphi 0, %s26
      %p23 = scmp.ge.s32.totalorder %s22, 4
      %s30 = sphi 0, %s30
      %s32 = sphi 0, %s30
      %s33 = sphi 0, %s32
      %s47 = sphi 0, %s33
      %s51 = sphi 0, %s51
      %s53 = sphi 0, %s51
      %s54 = sphi 0, %s53
      %s68 = sphi 0, %s54
      %s74 = sphi 0, %s76
      %s77 = sphi 0, %s74
      %s78 = sphi 0, %s77
      %s94 = sphi 0, %s78
      %s98 = sphi 0, %s98
      %s100 = sphi 0, %s98
      %s101 = sphi 0, %s100
      %s115 = sphi 0, %s101
      %s119 = sphi 0, %s119
      %s121 = sphi 0, %s119
      %s122 = sphi 0, %s121
      %s136 = sphi 0, %s122
      %s140 = sphi 0, %s140
      %s142 = sphi 0, %s140
      %s143 = sphi 0, %s142
      %s157 = sphi 0, %s143
      %s161 = sphi 0, %s161
      %s163 = sphi 0, %s161
      %s164 = sphi 0, %s163
      %s178 = sphi 0, %s164
      %s182 = sphi 0, %s182
      %s184 = sphi 0, %s182
      %s185 = sphi 0, %s184
      %s199 = sphi 0, %s185
      %s203 = sphi 0, %s203
      %s205 = sphi 0, %s203
      %s206 = sphi 0, %s205
      %s220 = sphi 0, %s206
      %s224 = sphi 0, %s224
      %s226 = sphi 0, %s224
      %s227 = sphi 0, %s226
      %s241 = sphi 0, %s227
      %s245 = sphi 0, %s245
      %s247 = sphi 0, %s245
      %s248 = sphi 0, %s247
      %s262 = sphi 0, %s248
      %s268 = sphi 0, %s270
      %s271 = sphi 0, %s268
      %s272 = sphi 0, %s271
      %s288 = sphi 0, %s272
      %s294 = sphi 0, %s296
      %s297 = sphi 0, %s294
      %s298 = sphi 0, %s297
      %s314 = sphi 0, %s298
    $region4: #{model_forward.1} parent=1 // loop_header_branch
      %25 = sbr.rel (%p23) target = $region8
    $region5: #{model_forward.1} parent=1 // loop_body
      %s27 = ssub.s32 %s22, 1
      %s28 = ssub.s32 %s22, 2
      %s29 = sadd.s32 %s22, 1
      %s31 = sadd.s32 %s30, 1
      %p34 = scmp.eq.s32.totalorder %s22, 1
      %p35 = scmp.ne.s32.totalorder %s30, %s32
      %p36 = scmp.eq.s32.totalorder %s22, 0
      %p37 = por %p35, %p36
      %p38 = scmp.ne.s32.totalorder %s30, %s32
      %p39 = scmp.eq.s32.totalorder %s27, 1
      %p40 = por %p38, %p39
      %p41 = scmp.ne.s32.totalorder %s32, %s33
      %p42 = scmp.eq.s32.totalorder %s27, 0
      %p43 = por %p41, %p42
      %p44 = scmp.ne.s32.totalorder %s32, %s33
      %p45 = scmp.eq.s32.totalorder %s28, 1
      %p46 = por %p44, %p45
      %p48 = scmp.ne.s32.totalorder %s33, %s47
      %p49 = scmp.eq.s32.totalorder %s28, 0
      %p50 = por %p48, %p49
      %s52 = sadd.s32 %s51, 1
      %p55 = scmp.eq.s32.totalorder %s22, 1
      %p56 = scmp.ne.s32.totalorder %s51, %s53
      %p57 = scmp.eq.s32.totalorder %s22, 0
      %p58 = por %p56, %p57
      %p59 = scmp.ne.s32.totalorder %s51, %s53
      %p60 = scmp.eq.s32.totalorder %s27, 1
      %p61 = por %p59, %p60
      %p62 = scmp.ne.s32.totalorder %s53, %s54
      %p63 = scmp.eq.s32.totalorder %s27, 0
      %p64 = por %p62, %p63
      %p65 = scmp.ne.s32.totalorder %s53, %s54
      %p66 = scmp.eq.s32.totalorder %s28, 1
      %p67 = por %p65, %p66
      %p69 = scmp.ne.s32.totalorder %s54, %s68
      %p70 = scmp.eq.s32.totalorder %s28, 0
      %p71 = por %p69, %p70
      %s72 = ssub.s32 %s22, %s29
      %p73 = scmp.eq.s32.totalorder %s72, 0
      %s75 = sadd.s32 %s74, 1
      %s76 = scalar_select %p73, %s74, %s75
      %p79 = pneg %p73
      %p80 = scmp.eq.s32.totalorder %s22, 1
      %p81 = por %p79, %p80
      %p82 = scmp.ne.s32.totalorder %s74, %s77
      %p83 = scmp.eq.s32.totalorder %s22, 0
      %p84 = por %p82, %p83
      %p85 = scmp.ne.s32.totalorder %s74, %s77
      %p86 = scmp.eq.s32.totalorder %s27, 1
      %p87 = por %p85, %p86
      %p88 = scmp.ne.s32.totalorder %s77, %s78
      %p89 = scmp.eq.s32.totalorder %s27, 0
      %p90 = por %p88, %p89
      %p91 = scmp.ne.s32.totalorder %s77, %s78
      %p92 = scmp.eq.s32.totalorder %s28, 1
      %p93 = por %p91, %p92
      %p95 = scmp.ne.s32.totalorder %s78, %s94
      %p96 = scmp.eq.s32.totalorder %s28, 0
      %p97 = por %p95, %p96
      %s99 = sadd.s32 %s98, 1
      %p102 = scmp.eq.s32.totalorder %s22, 1
      %p103 = scmp.ne.s32.totalorder %s98, %s100
      %p104 = scmp.eq.s32.totalorder %s22, 0
      %p105 = por %p103, %p104
      %p106 = scmp.ne.s32.totalorder %s98, %s100
      %p107 = scmp.eq.s32.totalorder %s27, 1
      %p108 = por %p106, %p107
      %p109 = scmp.ne.s32.totalorder %s100, %s101
      %p110 = scmp.eq.s32.totalorder %s27, 0
      %p111 = por %p109, %p110
      %p112 = scmp.ne.s32.totalorder %s100, %s101
      %p113 = scmp.eq.s32.totalorder %s28, 1
      %p114 = por %p112, %p113
      %p116 = scmp.ne.s32.totalorder %s101, %s115
      %p117 = scmp.eq.s32.totalorder %s28, 0
      %p118 = por %p116, %p117
      %s120 = sadd.s32 %s119, 1
      %p123 = scmp.eq.s32.totalorder %s22, 1
      %p124 = scmp.ne.s32.totalorder %s119, %s121
      %p125 = scmp.eq.s32.totalorder %s22, 0
      %p126 = por %p124, %p125
      %p127 = scmp.ne.s32.totalorder %s119, %s121
      %p128 = scmp.eq.s32.totalorder %s27, 1
      %p129 = por %p127, %p128
      %p130 = scmp.ne.s32.totalorder %s121, %s122
      %p131 = scmp.eq.s32.totalorder %s27, 0
      %p132 = por %p130, %p131
      %p133 = scmp.ne.s32.totalorder %s121, %s122
      %p134 = scmp.eq.s32.totalorder %s28, 1
      %p135 = por %p133, %p134
      %p137 = scmp.ne.s32.totalorder %s122, %s136
      %p138 = scmp.eq.s32.totalorder %s28, 0
      %p139 = por %p137, %p138
      %s141 = sadd.s32 %s140, 1
      %p144 = scmp.eq.s32.totalorder %s22, 1
      %p145 = scmp.ne.s32.totalorder %s140, %s142
      %p146 = scmp.eq.s32.totalorder %s22, 0
      %p147 = por %p145, %p146
      %p148 = scmp.ne.s32.totalorder %s140, %s142
      %p149 = scmp.eq.s32.totalorder %s27, 1
      %p150 = por %p148, %p149
      %p151 = scmp.ne.s32.totalorder %s142, %s143
      %p152 = scmp.eq.s32.totalorder %s27, 0
      %p153 = por %p151, %p152
      %p154 = scmp.ne.s32.totalorder %s142, %s143
      %p155 = scmp.eq.s32.totalorder %s28, 1
      %p156 = por %p154, %p155
      %p158 = scmp.ne.s32.totalorder %s143, %s157
      %p159 = scmp.eq.s32.totalorder %s28, 0
      %p160 = por %p158, %p159
      %s162 = sadd.s32 %s161, 1
      %p165 = scmp.eq.s32.totalorder %s22, 1
      %p166 = scmp.ne.s32.totalorder %s161, %s163
      %p167 = scmp.eq.s32.totalorder %s22, 0
      %p168 = por %p166, %p167
      %p169 = scmp.ne.s32.totalorder %s161, %s163
      %p170 = scmp.eq.s32.totalorder %s27, 1
      %p171 = por %p169, %p170
      %p172 = scmp.ne.s32.totalorder %s163, %s164
      %p173 = scmp.eq.s32.totalorder %s27, 0
      %p174 = por %p172, %p173
      %p175 = scmp.ne.s32.totalorder %s163, %s164
      %p176 = scmp.eq.s32.totalorder %s28, 1
      %p177 = por %p175, %p176
      %p179 = scmp.ne.s32.totalorder %s164, %s178
      %p180 = scmp.eq.s32.totalorder %s28, 0
      %p181 = por %p179, %p180
      %s183 = sadd.s32 %s182, 1
      %p186 = scmp.eq.s32.totalorder %s22, 1
      %p187 = scmp.ne.s32.totalorder %s182, %s184
      %p188 = scmp.eq.s32.totalorder %s22, 0
      %p189 = por %p187, %p188
      %p190 = scmp.ne.s32.totalorder %s182, %s184
      %p191 = scmp.eq.s32.totalorder %s27, 1
      %p192 = por %p190, %p191
      %p193 = scmp.ne.s32.totalorder %s184, %s185
      %p194 = scmp.eq.s32.totalorder %s27, 0
      %p195 = por %p193, %p194
      %p196 = scmp.ne.s32.totalorder %s184, %s185
      %p197 = scmp.eq.s32.totalorder %s28, 1
      %p198 = por %p196, %p197
      %p200 = scmp.ne.s32.totalorder %s185, %s199
      %p201 = scmp.eq.s32.totalorder %s28, 0
      %p202 = por %p200, %p201
      %s204 = sadd.s32 %s203, 1
      %p207 = scmp.eq.s32.totalorder %s22, 1
      %p208 = scmp.ne.s32.totalorder %s203, %s205
      %p209 = scmp.eq.s32.totalorder %s22, 0
      %p210 = por %p208, %p209
      %p211 = scmp.ne.s32.totalorder %s203, %s205
      %p212 = scmp.eq.s32.totalorder %s27, 1
      %p213 = por %p211, %p212
      %p214 = scmp.ne.s32.totalorder %s205, %s206
      %p215 = scmp.eq.s32.totalorder %s27, 0
      %p216 = por %p214, %p215
      %p217 = scmp.ne.s32.totalorder %s205, %s206
      %p218 = scmp.eq.s32.totalorder %s28, 1
      %p219 = por %p217, %p218
      %p221 = scmp.ne.s32.totalorder %s206, %s220
      %p222 = scmp.eq.s32.totalorder %s28, 0
      %p223 = por %p221, %p222
      %s225 = sadd.s32 %s224, 1
      %p228 = scmp.eq.s32.totalorder %s22, 1
      %p229 = scmp.ne.s32.totalorder %s224, %s226
      %p230 = scmp.eq.s32.totalorder %s22, 0
      %p231 = por %p229, %p230
      %p232 = scmp.ne.s32.totalorder %s224, %s226
      %p233 = scmp.eq.s32.totalorder %s27, 1
      %p234 = por %p232, %p233
      %p235 = scmp.ne.s32.totalorder %s226, %s227
      %p236 = scmp.eq.s32.totalorder %s27, 0
      %p237 = por %p235, %p236
      %p238 = scmp.ne.s32.totalorder %s226, %s227
      %p239 = scmp.eq.s32.totalorder %s28, 1
      %p240 = por %p238, %p239
      %p242 = scmp.ne.s32.totalorder %s227, %s241
      %p243 = scmp.eq.s32.totalorder %s28, 0
      %p244 = por %p242, %p243
      %s246 = sadd.s32 %s245, 1
      %p249 = scmp.eq.s32.totalorder %s22, 1
      %p250 = scmp.ne.s32.totalorder %s245, %s247
      %p251 = scmp.eq.s32.totalorder %s22, 0
      %p252 = por %p250, %p251
      %p253 = scmp.ne.s32.totalorder %s245, %s247
      %p254 = scmp.eq.s32.totalorder %s27, 1
      %p255 = por %p253, %p254
      %p256 = scmp.ne.s32.totalorder %s247, %s248
      %p257 = scmp.eq.s32.totalorder %s27, 0
      %p258 = por %p256, %p257
      %p259 = scmp.ne.s32.totalorder %s247, %s248
      %p260 = scmp.eq.s32.totalorder %s28, 1
      %p261 = por %p259, %p260
      %p263 = scmp.ne.s32.totalorder %s248, %s262
      %p264 = scmp.eq.s32.totalorder %s28, 0
      %p265 = por %p263, %p264
      %s266 = ssub.s32 %s22, %s29
      %p267 = scmp.eq.s32.totalorder %s266, 0
      %s269 = sadd.s32 %s268, 1
      %s270 = scalar_select %p267, %s268, %s269
      %p273 = pneg %p267
      %p274 = scmp.eq.s32.totalorder %s22, 1
      %p275 = por %p273, %p274
      %p276 = scmp.ne.s32.totalorder %s268, %s271
      %p277 = scmp.eq.s32.totalorder %s22, 0
      %p278 = por %p276, %p277
      %p279 = scmp.ne.s32.totalorder %s268, %s271
      %p280 = scmp.eq.s32.totalorder %s27, 1
      %p281 = por %p279, %p280
      %p282 = scmp.ne.s32.totalorder %s271, %s272
      %p283 = scmp.eq.s32.totalorder %s27, 0
      %p284 = por %p282, %p283
      %p285 = scmp.ne.s32.totalorder %s271, %s272
      %p286 = scmp.eq.s32.totalorder %s28, 1
      %p287 = por %p285, %p286
      %p289 = scmp.ne.s32.totalorder %s272, %s288
      %p290 = scmp.eq.s32.totalorder %s28, 0
      %p291 = por %p289, %p290
      %s292 = ssub.s32 %s22, %s29
      %p293 = scmp.eq.s32.totalorder %s292, 0
      %s295 = sadd.s32 %s294, 1
      %s296 = scalar_select %p293, %s294, %s295
      %p299 = pneg %p293
      %p300 = scmp.eq.s32.totalorder %s22, 1
      %p301 = por %p299, %p300
      %p302 = scmp.ne.s32.totalorder %s294, %s297
      %p303 = scmp.eq.s32.totalorder %s22, 0
      %p304 = por %p302, %p303
      %p305 = scmp.ne.s32.totalorder %s294, %s297
      %p306 = scmp.eq.s32.totalorder %s27, 1
      %p307 = por %p305, %p306
      %p308 = scmp.ne.s32.totalorder %s297, %s298
      %p309 = scmp.eq.s32.totalorder %s27, 0
      %p310 = por %p308, %p309
      %p311 = scmp.ne.s32.totalorder %s297, %s298
      %p312 = scmp.eq.s32.totalorder %s28, 1
      %p313 = por %p311, %p312
      %p315 = scmp.ne.s32.totalorder %s298, %s314
      %p316 = scmp.eq.s32.totalorder %s28, 0
      %p317 = por %p315, %p316
      %p318 = scmp.le.s32.totalorder 1, %s22
      %p319 = scmp.lt.s32.totalorder %s22, 3
      %p320 = pnand %p318, %p319
      %p321 = pneg %p320
      // Predicated region
      $region9: #{model_forward.1} parent=5 // pred_check
        _
      $region10: #{model_forward.1} parent=5 // pred_check_branch
        %323 = sbr.rel (%p320) target = $region12
      $region11: #{model_forward.1} parent=5 // pred_region
        %s324 = ssub.s32 %s22, 1
        // Predicated region
        $region13: #{model_forward.1} parent=11 // pred_check
          %p325 = pneg %p43
        $region14: #{model_forward.1} parent=11 // pred_check_branch
          %327 = sbr.rel (%p325) target = $region16
        $region15: #{model_forward.1} parent=11 // pred_region
          _
        $region16: #{model_forward.1} parent=11 // pred_fallthru
          _
        // Predicated region
        $region17: #{model_forward.1} parent=11 // pred_check
          %p328 = pneg %p64
        $region18: #{model_forward.1} parent=11 // pred_check_branch
          %330 = sbr.rel (%p328) target = $region20
        $region19: #{model_forward.1} parent=11 // pred_region
          _
        $region20: #{model_forward.1} parent=11 // pred_fallthru
          _
        // Predicated region
        $region21: #{model_forward.1} parent=11 // pred_check
          %p331 = pneg %p111
        $region22: #{model_forward.1} parent=11 // pred_check_branch
          %333 = sbr.rel (%p331) target = $region24
        $region23: #{model_forward.1} parent=11 // pred_region
          _
        $region24: #{model_forward.1} parent=11 // pred_fallthru
          _
        // Predicated region
        $region25: #{model_forward.1} parent=11 // pred_check
          %p334 = pneg %p132
        $region26: #{model_forward.1} parent=11 // pred_check_branch
          %336 = sbr.rel (%p334) target = $region28
        $region27: #{model_forward.1} parent=11 // pred_region
          _
        $region28: #{model_forward.1} parent=11 // pred_fallthru
          _
        // Predicated region
        $region29: #{model_forward.1} parent=11 // pred_check
          %p337 = pneg %p153
        $region30: #{model_forward.1} parent=11 // pred_check_branch
          %339 = sbr.rel (%p337) target = $region32
        $region31: #{model_forward.1} parent=11 // pred_region
          _
        $region32: #{model_forward.1} parent=11 // pred_fallthru
          _
        // Predicated region
        $region33: #{model_forward.1} parent=11 // pred_check
          %p340 = pneg %p174
        $region34: #{model_forward.1} parent=11 // pred_check_branch
          %342 = sbr.rel (%p340) target = $region36
        $region35: #{model_forward.1} parent=11 // pred_region
          _
        $region36: #{model_forward.1} parent=11 // pred_fallthru
          _
        // Predicated region
        $region37: #{model_forward.1} parent=11 // pred_check
          %p343 = pneg %p195
        $region38: #{model_forward.1} parent=11 // pred_check_branch
          %345 = sbr.rel (%p343) target = $region40
        $region39: #{model_forward.1} parent=11 // pred_region
          _
        $region40: #{model_forward.1} parent=11 // pred_fallthru
          _
        // Predicated region
        $region41: #{model_forward.1} parent=11 // pred_check
          %p346 = pneg %p216
        $region42: #{model_forward.1} parent=11 // pred_check_branch
          %348 = sbr.rel (%p346) target = $region44
        $region43: #{model_forward.1} parent=11 // pred_region
          _
        $region44: #{model_forward.1} parent=11 // pred_fallthru
          _
        // Predicated region
        $region45: #{model_forward.1} parent=11 // pred_check
          %p349 = pneg %p237
        $region46: #{model_forward.1} parent=11 // pred_check_branch
          %351 = sbr.rel (%p349) target = $region48
        $region47: #{model_forward.1} parent=11 // pred_region
          _
        $region48: #{model_forward.1} parent=11 // pred_fallthru
          _
        // Predicated region
        $region49: #{model_forward.1} parent=11 // pred_check
          %p352 = pneg %p258
        $region50: #{model_forward.1} parent=11 // pred_check_branch
          %354 = sbr.rel (%p352) target = $region52
        $region51: #{model_forward.1} parent=11 // pred_region
          _
        $region52: #{model_forward.1} parent=11 // pred_fallthru
          _
      $region12: #{model_forward.1} parent=5 // pred_fallthru
        _
      %p355 = scmp.lt.s32.totalorder %s22, 2
      // Predicated region
      $region53: #{model_forward.1} parent=5 // pred_check
        %p356 = pneg %p355
      $region54: #{model_forward.1} parent=5 // pred_check_branch
        %358 = sbr.rel (%p356) target = $region56
      $region55: #{model_forward.1} parent=5 // pred_region
        // Predicated region
        $region57: #{model_forward.1} parent=55 // pred_check
          %p359 = pneg %p84
        $region58: #{model_forward.1} parent=55 // pred_check_branch
          %361 = sbr.rel (%p359) target = $region60
        $region59: #{model_forward.1} parent=55 // pred_region
          %p362 = scmp.lt.s32.totalorder %s22, 1
          %s363 = scalar_select %p362, %s22, 1
          %s364 = smul.addr %s363, 16
          %s365 = smul.addr %s364, 8
          %s366 = scalar_lea.vmem %s2, %s365
        $region60: #{model_forward.1} parent=55 // pred_fallthru
          _
      $region56: #{model_forward.1} parent=5 // pred_fallthru
        _
      %p367 = scmp.le.s32.totalorder 1, %s22
      %p368 = scmp.lt.s32.totalorder %s22, 3
      %p369 = pnand %p367, %p368
      %p370 = pneg %p369
      // Predicated region
      $region61: #{model_forward.1} parent=5 // pred_check
        _
      $region62: #{model_forward.1} parent=5 // pred_check_branch
        %372 = sbr.rel (%p369) target = $region64
      $region63: #{model_forward.1} parent=5 // pred_region
        %s373 = ssub.s32 %s22, 1
        %p374 = pneg %p43
        %p375 = pneg %p40
        %p376 = pneg %p64
        %p377 = pneg %p61
        %p378 = scmp.lt.s32.totalorder %s27, 1
        %s379 = scalar_select %p378, %s27, 1
        %s380 = smul.addr %s379, 16
        %s381 = smul.addr %s380, 8
        %s382 = scalar_lea.vmem %s2, %s381
        %p383 = pneg %p90
        %p384 = pneg %p87
        %p385 = pneg %p111
        %p386 = pneg %p108
        %p387 = pneg %p132
        %p388 = pneg %p129
        %p389 = pneg %p153
        %p390 = pneg %p150
        %p391 = pneg %p174
        %p392 = pneg %p171
        %p393 = pneg %p195
        %p394 = pneg %p192
        %p395 = pneg %p216
        %p396 = pneg %p213
        %p397 = pneg %p237
        %p398 = pneg %p234
        %p399 = pneg %p258
        %p400 = pneg %p255
        %p401 = pneg %p284
        %p402 = pneg %p281
        %p403 = scmp.lt.s32.totalorder %s27, 1
        %s404 = scalar_select %p403, %s27, 1
        %s405 = smul.addr %s404, 16
        %s406 = smul.addr %s405, 8
        %s407 = scalar_lea.vmem %s11, %s406
        %p408 = pneg %p310
        %p409 = pneg %p307
        %s410 = sand.u32 %s297, 1
        %s411 = scalar_lea.sflag [#allocation3], %s410
        %s412 = sand.u32 %s297, 1
        %s413 = scalar_lea.vmem [#allocation2], %s412
        %p414 = scmp.lt.s32.totalorder %s27, 1
        %s415 = scalar_select %p414, %s27, 1
        %s416 = smul.addr %s415, 16
        %s417 = smul.addr %s416, 8
        %s418 = scalar_lea.vmem %s2, %s417
        %p419 = scmp.lt.s32.totalorder %s27, 1
        %s420 = scalar_select %p419, %s27, 1
        %s421 = smul.addr %s420, 16
        %s422 = smul.addr %s421, 8
        %s423 = scalar_lea.vmem %s11, %s422
        %v425 = vld [vmem:[%s0] sm:$0x3]
        %v426 = vld [vmem:[%s418] sm:$0xff]
        %v427 = vld [vmem:[%s418 + $0x8] sm:$0xff]
        %v428 = vld [vmem:[%s418 + $0x10] sm:$0xff]
        %v429 = vld [vmem:[%s418 + $0x18] sm:$0xff]
        %v430 = vld [vmem:[%s418 + $0x20] sm:$0xff]
        %v431 = vld [vmem:[%s418 + $0x28] sm:$0xff]
        %v432 = vld [vmem:[%s418 + $0x30] sm:$0xff]
        %v433 = vld [vmem:[%s418 + $0x38] sm:$0xff]
        %v434 = vld [vmem:[%s418 + $0x40] sm:$0xff]
        %v435 = vld [vmem:[%s418 + $0x48] sm:$0xff]
        %v436 = vld [vmem:[%s418 + $0x50] sm:$0xff]
        %v437 = vld [vmem:[%s418 + $0x58] sm:$0xff]
        %v438 = vld [vmem:[%s418 + $0x60] sm:$0xff]
        %v439 = vld [vmem:[%s418 + $0x68] sm:$0xff]
        %v440 = vld [vmem:[%s418 + $0x70] sm:$0xff]
        %v441 = vld [vmem:[%s418 + $0x78] sm:$0xff]
        %v442 = vpack.c.bf16 %v428, %v426
        %v443 = vpack.c.bf16 %v429, %v427
        %v444 = vpack.c.bf16 %v432, %v430
        %v445 = vpack.c.bf16 %v433, %v431
        %v446 = vpack.c.bf16 %v436, %v434
        %v447 = vpack.c.bf16 %v437, %v435
        %v448 = vpack.c.bf16 %v440, %v438
        %v449 = vpack.c.bf16 %v441, %v439
        %v450 = vld [vmem:[%s1] sm:$0xff]
        %v451 = vld [vmem:[%s1 + $0x8] sm:$0xff]
        %v452 = vld [vmem:[%s1 + $0x10] sm:$0xff]
        %v453 = vld [vmem:[%s1 + $0x18] sm:$0xff]
        %v454 = vld [vmem:[%s1 + $0x20] sm:$0xff]
        %v455 = vld [vmem:[%s1 + $0x28] sm:$0xff]
        %v456 = vld [vmem:[%s1 + $0x30] sm:$0xff]
        %v457 = vld [vmem:[%s1 + $0x38] sm:$0xff]
        %v458 = vld [vmem:[%s1 + $0x40] sm:$0xff]
        %v459 = vld [vmem:[%s1 + $0x48] sm:$0xff]
        %v460 = vld [vmem:[%s1 + $0x50] sm:$0xff]
        %v461 = vld [vmem:[%s1 + $0x58] sm:$0xff]
        %v462 = vld [vmem:[%s1 + $0x60] sm:$0xff]
        %v463 = vld [vmem:[%s1 + $0x68] sm:$0xff]
        %v464 = vld [vmem:[%s1 + $0x70] sm:$0xff]
        %v465 = vld [vmem:[%s1 + $0x78] sm:$0xff]
        %v466 = vld [vmem:[%s1 + $0x80] sm:$0xff]
        %v467 = vld [vmem:[%s1 + $0x88] sm:$0xff]
        %v468 = vld [vmem:[%s1 + $0x90] sm:$0xff]
        %v469 = vld [vmem:[%s1 + $0x98] sm:$0xff]
        %v470 = vld [vmem:[%s1 + $0xa0] sm:$0xff]
        %v471 = vld [vmem:[%s1 + $0xa8] sm:$0xff]
        %v472 = vld [vmem:[%s1 + $0xb0] sm:$0xff]
        %v473 = vld [vmem:[%s1 + $0xb8] sm:$0xff]
        %v474 = vld [vmem:[%s1 + $0xc0] sm:$0x33]
        %v500 = vunpack.c.l.b16 %v450
        %v501 = vunpack.c.h.b16 %v450
        %v502 = vunpack.c.l.b16 %v451
        %v503 = vunpack.c.h.b16 %v451
        %v504 = vunpack.c.l.b16 %v452
        %v505 = vunpack.c.h.b16 %v452
        %v506 = vunpack.c.l.b16 %v453
        %v507 = vunpack.c.h.b16 %v453
        %v508 = vunpack.c.l.b16 %v454
        %v509 = vunpack.c.h.b16 %v454
        %v510 = vunpack.c.l.b16 %v455
        %v511 = vunpack.c.h.b16 %v455
        %v512 = vunpack.c.l.b16 %v456
        %v513 = vunpack.c.h.b16 %v456
        %v514 = vunpack.c.l.b16 %v457
        %v515 = vunpack.c.h.b16 %v457
        %v516 = vunpack.c.l.b16 %v458
        %v517 = vunpack.c.h.b16 %v458
        %v518 = vunpack.c.l.b16 %v459
        %v519 = vunpack.c.h.b16 %v459
        %v520 = vunpack.c.l.b16 %v460
        %v521 = vunpack.c.h.b16 %v460
        %v522 = vunpack.c.l.b16 %v461
        %v523 = vunpack.c.h.b16 %v461
        %v524 = vunpack.c.l.b16 %v462
        %v525 = vunpack.c.h.b16 %v462
        %v526 = vunpack.c.l.b16 %v463
        %v527 = vunpack.c.h.b16 %v463
        %v528 = vunpack.c.l.b16 %v464
        %v529 = vunpack.c.h.b16 %v464
        %v530 = vunpack.c.l.b16 %v465
        %v531 = vunpack.c.h.b16 %v465
        %v532 = vunpack.c.l.b16 %v466
        %v533 = vunpack.c.h.b16 %v466
        %v534 = vunpack.c.l.b16 %v467
        %v535 = vunpack.c.h.b16 %v467
        %v536 = vunpack.c.l.b16 %v468
        %v537 = vunpack.c.h.b16 %v468
        %v538 = vunpack.c.l.b16 %v469
        %v539 = vunpack.c.h.b16 %v469
        %v540 = vunpack.c.l.b16 %v470
        %v541 = vunpack.c.h.b16 %v470
        %v542 = vunpack.c.l.b16 %v471
        %v543 = vunpack.c.h.b16 %v471
        %v544 = vunpack.c.l.b16 %v472
        %v545 = vunpack.c.h.b16 %v472
        %v546 = vunpack.c.l.b16 %v473
        %v547 = vunpack.c.h.b16 %v473
        %v548 = vunpack.c.l.b16 %v474
        %v549 = vunpack.c.h.b16 %v474
        %v550 = vpack.c.b16 %v502, %v500
        %v551 = vpack.c.b16 %v503, %v501
        %v552 = vpack.c.b16 %v506, %v504
        %v553 = vpack.c.b16 %v507, %v505
        %v554 = vpack.c.b16 %v510, %v508
        %v555 = vpack.c.b16 %v511, %v509
        %v556 = vpack.c.b16 %v514, %v512
        %v557 = vpack.c.b16 %v515, %v513
        %v558 = vpack.c.b16 %v518, %v516
        %v559 = vpack.c.b16 %v519, %v517
        %v560 = vpack.c.b16 %v522, %v520
        %v561 = vpack.c.b16 %v523, %v521
        %v562 = vpack.c.b16 %v526, %v524
        %v563 = vpack.c.b16 %v527, %v525
        %v564 = vpack.c.b16 %v530, %v528
        %v565 = vpack.c.b16 %v531, %v529
        %v566 = vpack.c.b16 %v534, %v532
        %v567 = vpack.c.b16 %v535, %v533
        %v568 = vpack.c.b16 %v538, %v536
        %v569 = vpack.c.b16 %v539, %v537
        %v570 = vpack.c.b16 %v542, %v540
        %v571 = vpack.c.b16 %v543, %v541
        %v572 = vpack.c.b16 %v546, %v544
        %v573 = vpack.c.b16 %v547, %v545
        %v574 = vpack.c.b16 %v548, %v548
        %v575 = vpack.c.b16 %v549, %v549
        %vm600 = vcmask 556032
        %v602 = vsel %vm600, %v443, 0
        %v605 = vsel %vm600, %v445, 0
        %v608 = vsel %vm600, %v447, 0
        %v611 = vsel %vm600, %v449, 0
        %vm613 = vcmask 1041408
        %v615 = vsel %vm613, %v574, 0
        %v618 = vsel %vm613, %v575, 0
        %620 = vmatprep.subr.bf16.mxu0 %v565
        %621 = vmatpush1.bf16.msra.mxu0 %v564
        %622 = vmatprep.subr.bf16.mxu0 %v563
        %623 = vmatpush1.bf16.msra.mxu0 %v562
        %624 = vmatprep.subr.bf16.mxu0 %v561
        %625 = vmatpush1.bf16.msra.mxu0 %v560
        %626 = vmatprep.subr.bf16.mxu0 %v559
        %627 = vmatpush1.bf16.msra.mxu0 %v558
        %628 = vmatprep.subr.bf16.mxu0 %v557
        %629 = vmatpush1.bf16.msra.mxu0 %v556
        %630 = vmatprep.subr.bf16.mxu0 %v555
        %631 = vmatpush1.bf16.msra.mxu0 %v554
        %632 = vmatprep.subr.bf16.mxu0 %v553
        %633 = vmatpush1.bf16.msra.mxu0 %v552
        %634 = vmatprep.subr.bf16.mxu0 %v551
        %635 = vmatpush1.bf16.msra.mxu0 %v550
        %636 = vmatprep.subr.bf16.mxu0 0
        %637 = vmatpush2.bf16.msra.mxu0 0
        %638 = vmatprep.subr.bf16.mxu0 0
        %639 = vmatpush2.bf16.msra.mxu0 0
        %640 = vmatprep.subr.bf16.mxu0 0
        %641 = vmatpush2.bf16.msra.mxu0 0
        %642 = vmatprep.subr.bf16.mxu0 %v618
        %643 = vmatpush2.bf16.msra.mxu0 %v615
        %644 = vmatprep.subr.bf16.mxu0 %v573
        %645 = vmatpush2.bf16.msra.mxu0 %v572
        %646 = vmatprep.subr.bf16.mxu0 %v571
        %647 = vmatpush2.bf16.msra.mxu0 %v570
        %648 = vmatprep.subr.bf16.mxu0 %v569
        %649 = vmatpush2.bf16.msra.mxu0 %v568
        %650 = vmatprep.subr.bf16.mxu0 %v567
        %651 = vmatpush2.bf16.msra.mxu0 %v566
        %652 = vmatprep.mubr.bf16.mxu0 %v602
        %653 = vmatmul.mubr.bf16.gmra.mxu0 %v442
        %v654 = vpop.f32.mrf.mxu0
        %v655 = vadd.f32 0.0, %v654
        %v656 = vpop.f32.mrf.mxu0
        %v657 = vadd.f32 0.0, %v656
        %v658 = vpop.f32.mrf.mxu0
        %v659 = vadd.f32 0.0, %v658
        %v660 = vpop.f32.mrf.mxu0
        %v661 = vadd.f32 0.0, %v660
        %662 = vmatprep.mubr.bf16.mxu0 %v605
        %663 = vmatmul.mubr.bf16.gmra.mxu0 %v444
        %v664 = vpop.f32.mrf.mxu0
        %v665 = vadd.f32 0.0, %v664
        %v666 = vpop.f32.mrf.mxu0
        %v667 = vadd.f32 0.0, %v666
        %v668 = vpop.f32.mrf.mxu0
        %v669 = vadd.f32 0.0, %v668
        %v670 = vpop.f32.mrf.mxu0
        %v671 = vadd.f32 0.0, %v670
        %672 = vmatprep.mubr.bf16.mxu0 %v608
        %673 = vmatmul.mubr.bf16.gmra.mxu0 %v446
        %v674 = vpop.f32.mrf.mxu0
        %v675 = vadd.f32 0.0, %v674
        %v676 = vpop.f32.mrf.mxu0
        %v677 = vadd.f32 0.0, %v676
        %v678 = vpop.f32.mrf.mxu0
        %v679 = vadd.f32 0.0, %v678
        %v680 = vpop.f32.mrf.mxu0
        %v681 = vadd.f32 0.0, %v680
        %682 = vmatprep.mubr.bf16.mxu0 %v611
        %683 = vmatmul.mubr.bf16.gmra.mxu0 %v448
        %v684 = vpop.f32.mrf.mxu0
        %v685 = vadd.f32 0.0, %v684
        %v686 = vpop.f32.mrf.mxu0
        %v687 = vadd.f32 0.0, %v686
        %v688 = vpop.f32.mrf.mxu0
        %v689 = vadd.f32 0.0, %v688
        %v690 = vpop.f32.mrf.mxu0
        %v691 = vadd.f32 0.0, %v690
        %692 = vdwg.mxu0
        %693 = vrot.lane.b32.xlu0 %v655, 1
        %v694 = vpop.permute.xlu0 %693
        %695 = vrot.lane.b32.xlu0 %v659, 1
        %v696 = vpop.permute.xlu0 %695
        %697 = vrot.lane.b32.xlu0 %v665, 1
        %v698 = vpop.permute.xlu0 %697
        %699 = vrot.lane.b32.xlu0 %v669, 1
        %v700 = vpop.permute.xlu0 %699
        %701 = vrot.lane.b32.xlu0 %v675, 1
        %v702 = vpop.permute.xlu0 %701
        %703 = vrot.lane.b32.xlu0 %v679, 1
        %v704 = vpop.permute.xlu0 %703
        %705 = vrot.lane.b32.xlu0 %v685, 1
        %v706 = vpop.permute.xlu0 %705
        %707 = vrot.lane.b32.xlu0 %v689, 1
        %v708 = vpop.permute.xlu0 %707
        %709 = vrot.lane.b32.xlu0 %v657, 1
        %v710 = vpop.permute.xlu0 %709
        %711 = vrot.lane.b32.xlu0 %v661, 1
        %v712 = vpop.permute.xlu0 %711
        %713 = vrot.lane.b32.xlu0 %v667, 1
        %v714 = vpop.permute.xlu0 %713
        %715 = vrot.lane.b32.xlu0 %v671, 1
        %v716 = vpop.permute.xlu0 %715
        %717 = vrot.lane.b32.xlu0 %v677, 1
        %v718 = vpop.permute.xlu0 %717
        %719 = vrot.lane.b32.xlu0 %v681, 1
        %v720 = vpop.permute.xlu0 %719
        %721 = vrot.lane.b32.xlu0 %v687, 1
        %v722 = vpop.permute.xlu0 %721
        %723 = vrot.lane.b32.xlu0 %v691, 1
        %v724 = vpop.permute.xlu0 %723
        %v725 = vlaneseq
        %v726 = vand.u32 %v725, 127
        %vm727 = vcmp.lt.s32.totalorder %v726, 1
        %v728 = vsel %vm727, %v694, %v710
        %v729 = vsel %vm727, %v696, %v712
        %v730 = vsel %vm727, %v698, %v714
        %v731 = vsel %vm727, %v700, %v716
        %v732 = vsel %vm727, %v702, %v718
        %v733 = vsel %vm727, %v704, %v720
        %v734 = vsel %vm727, %v706, %v722
        %v735 = vsel %vm727, %v708, %v724
        %v736 = vsel %vm727, %v710, %v694
        %v737 = vsel %vm727, %v712, %v696
        %v738 = vsel %vm727, %v714, %v698
        %v739 = vsel %vm727, %v716, %v700
        %v740 = vsel %vm727, %v718, %v702
        %v741 = vsel %vm727, %v720, %v704
        %v742 = vsel %vm727, %v722, %v706
        %v743 = vsel %vm727, %v724, %v708
        %744 = vrot.lane.b32.xlu0 %v655, 127
        %v745 = vpop.permute.xlu0 %744
        %746 = vrot.lane.b32.xlu0 %v659, 127
        %v747 = vpop.permute.xlu0 %746
        %748 = vrot.lane.b32.xlu0 %v665, 127
        %v749 = vpop.permute.xlu0 %748
        %750 = vrot.lane.b32.xlu0 %v669, 127
        %v751 = vpop.permute.xlu0 %750
        %752 = vrot.lane.b32.xlu0 %v675, 127
        %v753 = vpop.permute.xlu0 %752
        %754 = vrot.lane.b32.xlu0 %v679, 127
        %v755 = vpop.permute.xlu0 %754
        %756 = vrot.lane.b32.xlu0 %v685, 127
        %v757 = vpop.permute.xlu0 %756
        %758 = vrot.lane.b32.xlu0 %v689, 127
        %v759 = vpop.permute.xlu0 %758
        %760 = vrot.lane.b32.xlu0 %v657, 127
        %v761 = vpop.permute.xlu0 %760
        %762 = vrot.lane.b32.xlu0 %v661, 127
        %v763 = vpop.permute.xlu0 %762
        %764 = vrot.lane.b32.xlu0 %v667, 127
        %v765 = vpop.permute.xlu0 %764
        %766 = vrot.lane.b32.xlu0 %v671, 127
        %v767 = vpop.permute.xlu0 %766
        %768 = vrot.lane.b32.xlu0 %v677, 127
        %v769 = vpop.permute.xlu0 %768
        %770 = vrot.lane.b32.xlu0 %v681, 127
        %v771 = vpop.permute.xlu0 %770
        %772 = vrot.lane.b32.xlu0 %v687, 127
        %v773 = vpop.permute.xlu0 %772
        %774 = vrot.lane.b32.xlu0 %v691, 127
        %v775 = vpop.permute.xlu0 %774
        %vm776 = vcmp.lt.s32.totalorder %v726, 127
        %v777 = vsel %vm776, %v745, %v761
        %v778 = vsel %vm776, %v747, %v763
        %v779 = vsel %vm776, %v749, %v765
        %v780 = vsel %vm776, %v751, %v767
        %v781 = vsel %vm776, %v753, %v769
        %v782 = vsel %vm776, %v755, %v771
        %v783 = vsel %vm776, %v757, %v773
        %v784 = vsel %vm776, %v759, %v775
        %v785 = vsel %vm776, %v761, %v745
        %v786 = vsel %vm776, %v763, %v747
        %v787 = vsel %vm776, %v765, %v749
        %v788 = vsel %vm776, %v767, %v751
        %v789 = vsel %vm776, %v769, %v753
        %v790 = vsel %vm776, %v771, %v755
        %v791 = vsel %vm776, %v773, %v757
        %v792 = vsel %vm776, %v775, %v759
        %v793 = vpack.c.bf16 %v737, %v736
        %v794 = vpack.c.bf16 %v729, %v728
        %v795 = vpack.c.bf16 %v739, %v738
        %v796 = vpack.c.bf16 %v731, %v730
        %v797 = vpack.c.bf16 %v741, %v740
        %v798 = vpack.c.bf16 %v733, %v732
        %v799 = vpack.c.bf16 %v743, %v742
        %v800 = vpack.c.bf16 %v735, %v734
        %v801 = vpack.c.bf16 %v659, %v655
        %v802 = vpack.c.bf16 %v661, %v657
        %v803 = vpack.c.bf16 %v669, %v665
        %v804 = vpack.c.bf16 %v671, %v667
        %v805 = vpack.c.bf16 %v679, %v675
        %v806 = vpack.c.bf16 %v681, %v677
        %v807 = vpack.c.bf16 %v689, %v685
        %v808 = vpack.c.bf16 %v691, %v687
        %v809 = vpack.c.bf16 %v778, %v777
        %v810 = vpack.c.bf16 %v786, %v785
        %v811 = vpack.c.bf16 %v780, %v779
        %v812 = vpack.c.bf16 %v788, %v787
        %v813 = vpack.c.bf16 %v782, %v781
        %v814 = vpack.c.bf16 %v790, %v789
        %v815 = vpack.c.bf16 %v784, %v783
        %v816 = vpack.c.bf16 %v792, %v791
        %v817 = vld [vmem:[%s3] sm:$0xff]
        %v818 = vld [vmem:[%s3 + $0x8] sm:$0xff]
        %v819 = vld [vmem:[%s3 + $0x10] sm:$0xff]
        %v820 = vld [vmem:[%s3 + $0x18] sm:$0xff]
        %v821 = vld [vmem:[%s3 + $0x20] sm:$0xff]
        %v822 = vld [vmem:[%s3 + $0x28] sm:$0xff]
        %v823 = vld [vmem:[%s3 + $0x30] sm:$0xff]
        %v824 = vld [vmem:[%s3 + $0x38] sm:$0xff]
        %v833 = vunpack.c.l.b16 %v817
        %v834 = vunpack.c.h.b16 %v817
        %v835 = vunpack.c.l.b16 %v818
        %v836 = vunpack.c.h.b16 %v818
        %v837 = vunpack.c.l.b16 %v819
        %v838 = vunpack.c.h.b16 %v819
        %v839 = vunpack.c.l.b16 %v820
        %v840 = vunpack.c.h.b16 %v820
        %v841 = vunpack.c.l.b16 %v821
        %v842 = vunpack.c.h.b16 %v821
        %v843 = vunpack.c.l.b16 %v822
        %v844 = vunpack.c.h.b16 %v822
        %v845 = vunpack.c.l.b16 %v823
        %v846 = vunpack.c.h.b16 %v823
        %v847 = vunpack.c.l.b16 %v824
        %v848 = vunpack.c.h.b16 %v824
        %v849 = vpack.c.b16 %v835, %v833
        %v850 = vpack.c.b16 %v836, %v834
        %v851 = vpack.c.b16 %v839, %v837
        %v852 = vpack.c.b16 %v840, %v838
        %v853 = vpack.c.b16 %v843, %v841
        %v854 = vpack.c.b16 %v844, %v842
        %v855 = vpack.c.b16 %v847, %v845
        %v856 = vpack.c.b16 %v848, %v846
        %vm861 = vcmask 523264
        %v863 = vsel %vm861, %v850, 0
        %v866 = vsel %vm861, %v852, 0
        %v869 = vsel %vm861, %v854, 0
        %v872 = vsel %vm861, %v856, 0
        %874 = vmatprep.subr.bf16.mxu0 %v808
        %875 = vmatpush1.bf16.msra.mxu0 %v807
        %876 = vmatprep.subr.bf16.mxu0 %v806
        %877 = vmatpush1.bf16.msra.mxu0 %v805
        %878 = vmatprep.subr.bf16.mxu0 %v804
        %879 = vmatpush1.bf16.msra.mxu0 %v803
        %880 = vmatprep.subr.bf16.mxu0 %v802
        %881 = vmatpush1.bf16.msra.mxu0 %v801
        %882 = vmatprep.subr.bf16.mxu0 %v800
        %883 = vmatpush1.bf16.msra.mxu0 %v799
        %884 = vmatprep.subr.bf16.mxu0 %v798
        %885 = vmatpush1.bf16.msra.mxu0 %v797
        %886 = vmatprep.subr.bf16.mxu0 %v796
        %887 = vmatpush1.bf16.msra.mxu0 %v795
        %888 = vmatprep.subr.bf16.mxu0 %v794
        %889 = vmatpush1.bf16.msra.mxu0 %v793
        %890 = vmatprep.subr.bf16.mxu0 0
        %891 = vmatpush2.bf16.msra.mxu0 0
        %892 = vmatprep.subr.bf16.mxu0 0
        %893 = vmatpush2.bf16.msra.mxu0 0
        %894 = vmatprep.subr.bf16.mxu0 0
        %895 = vmatpush2.bf16.msra.mxu0 0
        %896 = vmatprep.subr.bf16.mxu0 0
        %897 = vmatpush2.bf16.msra.mxu0 0
        %898 = vmatprep.subr.bf16.mxu0 %v816
        %899 = vmatpush2.bf16.msra.mxu0 %v815
        %900 = vmatprep.subr.bf16.mxu0 %v814
        %901 = vmatpush2.bf16.msra.mxu0 %v813
        %902 = vmatprep.subr.bf16.mxu0 %v812
        %903 = vmatpush2.bf16.msra.mxu0 %v811
        %904 = vmatprep.subr.bf16.mxu0 %v810
        %905 = vmatpush2.bf16.msra.mxu0 %v809
        %906 = vmatprep.mubr.bf16.mxu0 %v863
        %907 = vmatmul.mubr.bf16.gmra.mxu0 %v849
        %v908 = vpop.f32.mrf.mxu0
        %v909 = vadd.f32 0.0, %v908
        %v910 = vpop.f32.mrf.mxu0
        %v911 = vadd.f32 0.0, %v910
        %v912 = vpop.f32.mrf.mxu0
        %v913 = vadd.f32 0.0, %v912
        %v914 = vpop.f32.mrf.mxu0
        %v915 = vadd.f32 0.0, %v914
        %916 = vmatprep.mubr.bf16.mxu0 %v866
        %917 = vmatmul.mubr.bf16.gmra.mxu0 %v851
        %v918 = vpop.f32.mrf.mxu0
        %v919 = vadd.f32 0.0, %v918
        %v920 = vpop.f32.mrf.mxu0
        %v921 = vadd.f32 0.0, %v920
        %v922 = vpop.f32.mrf.mxu0
        %v923 = vadd.f32 0.0, %v922
        %v924 = vpop.f32.mrf.mxu0
        %v925 = vadd.f32 0.0, %v924
        %926 = vmatprep.mubr.bf16.mxu0 %v869
        %927 = vmatmul.mubr.bf16.gmra.mxu0 %v853
        %v928 = vpop.f32.mrf.mxu0
        %v929 = vadd.f32 0.0, %v928
        %v930 = vpop.f32.mrf.mxu0
        %v931 = vadd.f32 0.0, %v930
        %v932 = vpop.f32.mrf.mxu0
        %v933 = vadd.f32 0.0, %v932
        %v934 = vpop.f32.mrf.mxu0
        %v935 = vadd.f32 0.0, %v934
        %936 = vmatprep.mubr.bf16.mxu0 %v872
        %937 = vmatmul.mubr.bf16.gmra.mxu0 %v855
        %v938 = vpop.f32.mrf.mxu0
        %v939 = vadd.f32 0.0, %v938
        %v940 = vpop.f32.mrf.mxu0
        %v941 = vadd.f32 0.0, %v940
        %v942 = vpop.f32.mrf.mxu0
        %v943 = vadd.f32 0.0, %v942
        %v944 = vpop.f32.mrf.mxu0
        %v945 = vadd.f32 0.0, %v944
        %946 = vdwg.mxu0
        %s947 = scalar_lea.vmem %s3, 64
        %v948 = vld [vmem:[%s947] sm:$0xff]
        %v949 = vld [vmem:[%s947 + $0x8] sm:$0xff]
        %v950 = vld [vmem:[%s947 + $0x10] sm:$0xff]
        %v951 = vld [vmem:[%s947 + $0x18] sm:$0xff]
        %v952 = vld [vmem:[%s947 + $0x20] sm:$0xff]
        %v953 = vld [vmem:[%s947 + $0x28] sm:$0xff]
        %v954 = vld [vmem:[%s947 + $0x30] sm:$0xff]
        %v955 = vld [vmem:[%s947 + $0x38] sm:$0xff]
        %v964 = vunpack.c.l.b16 %v948
        %v965 = vunpack.c.h.b16 %v948
        %v966 = vunpack.c.l.b16 %v949
        %v967 = vunpack.c.h.b16 %v949
        %v968 = vunpack.c.l.b16 %v950
        %v969 = vunpack.c.h.b16 %v950
        %v970 = vunpack.c.l.b16 %v951
        %v971 = vunpack.c.h.b16 %v951
        %v972 = vunpack.c.l.b16 %v952
        %v973 = vunpack.c.h.b16 %v952
        %v974 = vunpack.c.l.b16 %v953
        %v975 = vunpack.c.h.b16 %v953
        %v976 = vunpack.c.l.b16 %v954
        %v977 = vunpack.c.h.b16 %v954
        %v978 = vunpack.c.l.b16 %v955
        %v979 = vunpack.c.h.b16 %v955
        %v980 = vpack.c.b16 %v966, %v964
        %v981 = vpack.c.b16 %v967, %v965
        %v982 = vpack.c.b16 %v970, %v968
        %v983 = vpack.c.b16 %v971, %v969
        %v984 = vpack.c.b16 %v974, %v972
        %v985 = vpack.c.b16 %v975, %v973
        %v986 = vpack.c.b16 %v978, %v976
        %v987 = vpack.c.b16 %v979, %v977
        %v993 = vsel %vm861, %v981, 0
        %v996 = vsel %vm861, %v983, 0
        %v999 = vsel %vm861, %v985, 0
        %v1002 = vsel %vm861, %v987, 0
        %1004 = vmatprep.subr.bf16.mxu0 %v808
        %1005 = vmatpush1.bf16.msra.mxu0 %v807
        %1006 = vmatprep.subr.bf16.mxu0 %v806
        %1007 = vmatpush1.bf16.msra.mxu0 %v805
        %1008 = vmatprep.subr.bf16.mxu0 %v804
        %1009 = vmatpush1.bf16.msra.mxu0 %v803
        %1010 = vmatprep.subr.bf16.mxu0 %v802
        %1011 = vmatpush1.bf16.msra.mxu0 %v801
        %1012 = vmatprep.subr.bf16.mxu0 %v800
        %1013 = vmatpush1.bf16.msra.mxu0 %v799
        %1014 = vmatprep.subr.bf16.mxu0 %v798
        %1015 = vmatpush1.bf16.msra.mxu0 %v797
        %1016 = vmatprep.subr.bf16.mxu0 %v796
        %1017 = vmatpush1.bf16.msra.mxu0 %v795
        %1018 = vmatprep.subr.bf16.mxu0 %v794
        %1019 = vmatpush1.bf16.msra.mxu0 %v793
        %1020 = vmatprep.subr.bf16.mxu0 0
        %1021 = vmatpush2.bf16.msra.mxu0 0
        %1022 = vmatprep.subr.bf16.mxu0 0
        %1023 = vmatpush2.bf16.msra.mxu0 0
        %1024 = vmatprep.subr.bf16.mxu0 0
        %1025 = vmatpush2.bf16.msra.mxu0 0
        %1026 = vmatprep.subr.bf16.mxu0 0
        %1027 = vmatpush2.bf16.msra.mxu0 0
        %1028 = vmatprep.subr.bf16.mxu0 %v816
        %1029 = vmatpush2.bf16.msra.mxu0 %v815
        %1030 = vmatprep.subr.bf16.mxu0 %v814
        %1031 = vmatpush2.bf16.msra.mxu0 %v813
        %1032 = vmatprep.subr.bf16.mxu0 %v812
        %1033 = vmatpush2.bf16.msra.mxu0 %v811
        %1034 = vmatprep.subr.bf16.mxu0 %v810
        %1035 = vmatpush2.bf16.msra.mxu0 %v809
        %1036 = vmatprep.mubr.bf16.mxu0 %v993
        %1037 = vmatmul.mubr.bf16.gmra.mxu0 %v980
        %v1038 = vpop.f32.mrf.mxu0
        %v1039 = vadd.f32 0.0, %v1038
        %v1040 = vpop.f32.mrf.mxu0
        %v1041 = vadd.f32 0.0, %v1040
        %v1042 = vpop.f32.mrf.mxu0
        %v1043 = vadd.f32 0.0, %v1042
        %v1044 = vpop.f32.mrf.mxu0
        %v1045 = vadd.f32 0.0, %v1044
        %1046 = vmatprep.mubr.bf16.mxu0 %v996
        %1047 = vmatmul.mubr.bf16.gmra.mxu0 %v982
        %v1048 = vpop.f32.mrf.mxu0
        %v1049 = vadd.f32 0.0, %v1048
        %v1050 = vpop.f32.mrf.mxu0
        %v1051 = vadd.f32 0.0, %v1050
        %v1052 = vpop.f32.mrf.mxu0
        %v1053 = vadd.f32 0.0, %v1052
        %v1054 = vpop.f32.mrf.mxu0
        %v1055 = vadd.f32 0.0, %v1054
        %1056 = vmatprep.mubr.bf16.mxu0 %v999
        %1057 = vmatmul.mubr.bf16.gmra.mxu0 %v984
        %v1058 = vpop.f32.mrf.mxu0
        %v1059 = vadd.f32 0.0, %v1058
        %v1060 = vpop.f32.mrf.mxu0
        %v1061 = vadd.f32 0.0, %v1060
        %v1062 = vpop.f32.mrf.mxu0
        %v1063 = vadd.f32 0.0, %v1062
        %v1064 = vpop.f32.mrf.mxu0
        %v1065 = vadd.f32 0.0, %v1064
        %1066 = vmatprep.mubr.bf16.mxu0 %v1002
        %1067 = vmatmul.mubr.bf16.gmra.mxu0 %v986
        %v1068 = vpop.f32.mrf.mxu0
        %v1069 = vadd.f32 0.0, %v1068
        %v1070 = vpop.f32.mrf.mxu0
        %v1071 = vadd.f32 0.0, %v1070
        %v1072 = vpop.f32.mrf.mxu0
        %v1073 = vadd.f32 0.0, %v1072
        %v1074 = vpop.f32.mrf.mxu0
        %v1075 = vadd.f32 0.0, %v1074
        %1076 = vdwg.mxu0
        %s1077 = scalar_lea.vmem %s3, 128
        %v1078 = vld [vmem:[%s1077] sm:$0xff]
        %v1079 = vld [vmem:[%s1077 + $0x8] sm:$0xff]
        %v1080 = vld [vmem:[%s1077 + $0x10] sm:$0xff]
        %v1081 = vld [vmem:[%s1077 + $0x18] sm:$0xff]
        %v1082 = vld [vmem:[%s1077 + $0x20] sm:$0xff]
        %v1083 = vld [vmem:[%s1077 + $0x28] sm:$0xff]
        %v1084 = vld [vmem:[%s1077 + $0x30] sm:$0xff]
        %v1085 = vld [vmem:[%s1077 + $0x38] sm:$0xff]
        %v1094 = vunpack.c.l.b16 %v1078
        %v1095 = vunpack.c.h.b16 %v1078
        %v1096 = vunpack.c.l.b16 %v1079
        %v1097 = vunpack.c.h.b16 %v1079
        %v1098 = vunpack.c.l.b16 %v1080
        %v1099 = vunpack.c.h.b16 %v1080
        %v1100 = vunpack.c.l.b16 %v1081
        %v1101 = vunpack.c.h.b16 %v1081
        %v1102 = vunpack.c.l.b16 %v1082
        %v1103 = vunpack.c.h.b16 %v1082
        %v1104 = vunpack.c.l.b16 %v1083
        %v1105 = vunpack.c.h.b16 %v1083
        %v1106 = vunpack.c.l.b16 %v1084
        %v1107 = vunpack.c.h.b16 %v1084
        %v1108 = vunpack.c.l.b16 %v1085
        %v1109 = vunpack.c.h.b16 %v1085
        %v1110 = vpack.c.b16 %v1096, %v1094
        %v1111 = vpack.c.b16 %v1097, %v1095
        %v1112 = vpack.c.b16 %v1100, %v1098
        %v1113 = vpack.c.b16 %v1101, %v1099
        %v1114 = vpack.c.b16 %v1104, %v1102
        %v1115 = vpack.c.b16 %v1105, %v1103
        %v1116 = vpack.c.b16 %v1108, %v1106
        %v1117 = vpack.c.b16 %v1109, %v1107
        %v1123 = vsel %vm861, %v1111, 0
        %v1126 = vsel %vm861, %v1113, 0
        %v1129 = vsel %vm861, %v1115, 0
        %v1132 = vsel %vm861, %v1117, 0
        %1134 = vmatprep.subr.bf16.mxu0 %v808
        %1135 = vmatpush1.bf16.msra.mxu0 %v807
        %1136 = vmatprep.subr.bf16.mxu0 %v806
        %1137 = vmatpush1.bf16.msra.mxu0 %v805
        %1138 = vmatprep.subr.bf16.mxu0 %v804
        %1139 = vmatpush1.bf16.msra.mxu0 %v803
        %1140 = vmatprep.subr.bf16.mxu0 %v802
        %1141 = vmatpush1.bf16.msra.mxu0 %v801
        %1142 = vmatprep.subr.bf16.mxu0 %v800
        %1143 = vmatpush1.bf16.msra.mxu0 %v799
        %1144 = vmatprep.subr.bf16.mxu0 %v798
        %1145 = vmatpush1.bf16.msra.mxu0 %v797
        %1146 = vmatprep.subr.bf16.mxu0 %v796
        %1147 = vmatpush1.bf16.msra.mxu0 %v795
        %1148 = vmatprep.subr.bf16.mxu0 %v794
        %1149 = vmatpush1.bf16.msra.mxu0 %v793
        %1150 = vmatprep.subr.bf16.mxu0 0
        %1151 = vmatpush2.bf16.msra.mxu0 0
        %1152 = vmatprep.subr.bf16.mxu0 0
        %1153 = vmatpush2.bf16.msra.mxu0 0
        %1154 = vmatprep.subr.bf16.mxu0 0
        %1155 = vmatpush2.bf16.msra.mxu0 0
        %1156 = vmatprep.subr.bf16.mxu0 0
        %1157 = vmatpush2.bf16.msra.mxu0 0
        %1158 = vmatprep.subr.bf16.mxu0 %v816
        %1159 = vmatpush2.bf16.msra.mxu0 %v815
        %1160 = vmatprep.subr.bf16.mxu0 %v814
        %1161 = vmatpush2.bf16.msra.mxu0 %v813
        %1162 = vmatprep.subr.bf16.mxu0 %v812
        %1163 = vmatpush2.bf16.msra.mxu0 %v811
        %1164 = vmatprep.subr.bf16.mxu0 %v810
        %1165 = vmatpush2.bf16.msra.mxu0 %v809
        %1166 = vmatprep.mubr.bf16.mxu0 %v1123
        %1167 = vmatmul.mubr.bf16.gmra.mxu0 %v1110
        %v1168 = vpop.f32.mrf.mxu0
        %v1169 = vadd.f32 0.0, %v1168
        %v1170 = vpop.f32.mrf.mxu0
        %v1171 = vadd.f32 0.0, %v1170
        %v1172 = vpop.f32.mrf.mxu0
        %v1173 = vadd.f32 0.0, %v1172
        %v1174 = vpop.f32.mrf.mxu0
        %v1175 = vadd.f32 0.0, %v1174
        %1176 = vmatprep.mubr.bf16.mxu0 %v1126
        %1177 = vmatmul.mubr.bf16.gmra.mxu0 %v1112
        %v1178 = vpop.f32.mrf.mxu0
        %v1179 = vadd.f32 0.0, %v1178
        %v1180 = vpop.f32.mrf.mxu0
        %v1181 = vadd.f32 0.0, %v1180
        %v1182 = vpop.f32.mrf.mxu0
        %v1183 = vadd.f32 0.0, %v1182
        %v1184 = vpop.f32.mrf.mxu0
        %v1185 = vadd.f32 0.0, %v1184
        %1186 = vmatprep.mubr.bf16.mxu0 %v1129
        %1187 = vmatmul.mubr.bf16.gmra.mxu0 %v1114
        %v1188 = vpop.f32.mrf.mxu0
        %v1189 = vadd.f32 0.0, %v1188
        %v1190 = vpop.f32.mrf.mxu0
        %v1191 = vadd.f32 0.0, %v1190
        %v1192 = vpop.f32.mrf.mxu0
        %v1193 = vadd.f32 0.0, %v1192
        %v1194 = vpop.f32.mrf.mxu0
        %v1195 = vadd.f32 0.0, %v1194
        %1196 = vmatprep.mubr.bf16.mxu0 %v1132
        %1197 = vmatmul.mubr.bf16.gmra.mxu0 %v1116
        %v1198 = vpop.f32.mrf.mxu0
        %v1199 = vadd.f32 0.0, %v1198
        %v1200 = vpop.f32.mrf.mxu0
        %v1201 = vadd.f32 0.0, %v1200
        %v1202 = vpop.f32.mrf.mxu0
        %v1203 = vadd.f32 0.0, %v1202
        %v1204 = vpop.f32.mrf.mxu0
        %v1205 = vadd.f32 0.0, %v1204
        %1206 = vdwg.mxu0
        %1207 = vrot.lane.b32.xlu0 %v909, 16
        %v1208 = vpop.permute.xlu0 %1207
        %1209 = vrot.lane.b32.xlu0 %v913, 16
        %v1210 = vpop.permute.xlu0 %1209
        %1211 = vrot.lane.b32.xlu0 %v919, 16
        %v1212 = vpop.permute.xlu0 %1211
        %1213 = vrot.lane.b32.xlu0 %v923, 16
        %v1214 = vpop.permute.xlu0 %1213
        %1215 = vrot.lane.b32.xlu0 %v929, 16
        %v1216 = vpop.permute.xlu0 %1215
        %1217 = vrot.lane.b32.xlu0 %v933, 16
        %v1218 = vpop.permute.xlu0 %1217
        %1219 = vrot.lane.b32.xlu0 %v939, 16
        %v1220 = vpop.permute.xlu0 %1219
        %1221 = vrot.lane.b32.xlu0 %v943, 16
        %v1222 = vpop.permute.xlu0 %1221
        %1223 = vrot.lane.b32.xlu0 %v911, 16
        %v1224 = vpop.permute.xlu0 %1223
        %1225 = vrot.lane.b32.xlu0 %v915, 16
        %v1226 = vpop.permute.xlu0 %1225
        %1227 = vrot.lane.b32.xlu0 %v921, 16
        %v1228 = vpop.permute.xlu0 %1227
        %1229 = vrot.lane.b32.xlu0 %v925, 16
        %v1230 = vpop.permute.xlu0 %1229
        %1231 = vrot.lane.b32.xlu0 %v931, 16
        %v1232 = vpop.permute.xlu0 %1231
        %1233 = vrot.lane.b32.xlu0 %v935, 16
        %v1234 = vpop.permute.xlu0 %1233
        %1235 = vrot.lane.b32.xlu0 %v941, 16
        %v1236 = vpop.permute.xlu0 %1235
        %1237 = vrot.lane.b32.xlu0 %v945, 16
        %v1238 = vpop.permute.xlu0 %1237
        %vm1239 = vcmp.lt.s32.totalorder %v726, 16
        %v1240 = vsel %vm1239, %v1208, %v1224
        %v1241 = vsel %vm1239, %v1210, %v1226
        %v1242 = vsel %vm1239, %v1212, %v1228
        %v1243 = vsel %vm1239, %v1214, %v1230
        %v1244 = vsel %vm1239, %v1216, %v1232
        %v1245 = vsel %vm1239, %v1218, %v1234
        %v1246 = vsel %vm1239, %v1220, %v1236
        %v1247 = vsel %vm1239, %v1222, %v1238
        %v1248 = vsel %vm1239, %v1224, %v1208
        %v1249 = vsel %vm1239, %v1226, %v1210
        %v1250 = vsel %vm1239, %v1228, %v1212
        %v1251 = vsel %vm1239, %v1230, %v1214
        %v1252 = vsel %vm1239, %v1232, %v1216
        %v1253 = vsel %vm1239, %v1234, %v1218
        %v1254 = vsel %vm1239, %v1236, %v1220
        %v1255 = vsel %vm1239, %v1238, %v1222
        %v1256 = vadd.f32 %v1248, %v1039
        %v1257 = vadd.f32 %v1240, %v1041
        %v1258 = vadd.f32 %v1249, %v1043
        %v1259 = vadd.f32 %v1241, %v1045
        %v1260 = vadd.f32 %v1250, %v1049
        %v1261 = vadd.f32 %v1242, %v1051
        %v1262 = vadd.f32 %v1251, %v1053
        %v1263 = vadd.f32 %v1243, %v1055
        %v1264 = vadd.f32 %v1252, %v1059
        %v1265 = vadd.f32 %v1244, %v1061
        %v1266 = vadd.f32 %v1253, %v1063
        %v1267 = vadd.f32 %v1245, %v1065
        %v1268 = vadd.f32 %v1254, %v1069
        %v1269 = vadd.f32 %v1246, %v1071
        %v1270 = vadd.f32 %v1255, %v1073
        %v1271 = vadd.f32 %v1247, %v1075
        %1272 = vrot.lane.b32.xlu0 %v1169, 112
        %v1273 = vpop.permute.xlu0 %1272
        %1274 = vrot.lane.b32.xlu0 %v1173, 112
        %v1275 = vpop.permute.xlu0 %1274
        %1276 = vrot.lane.b32.xlu0 %v1179, 112
        %v1277 = vpop.permute.xlu0 %1276
        %1278 = vrot.lane.b32.xlu0 %v1183, 112
        %v1279 = vpop.permute.xlu0 %1278
        %1280 = vrot.lane.b32.xlu0 %v1189, 112
        %v1281 = vpop.permute.xlu0 %1280
        %1282 = vrot.lane.b32.xlu0 %v1193, 112
        %v1283 = vpop.permute.xlu0 %1282
        %1284 = vrot.lane.b32.xlu0 %v1199, 112
        %v1285 = vpop.permute.xlu0 %1284
        %1286 = vrot.lane.b32.xlu0 %v1203, 112
        %v1287 = vpop.permute.xlu0 %1286
        %1288 = vrot.lane.b32.xlu0 %v1171, 112
        %v1289 = vpop.permute.xlu0 %1288
        %1290 = vrot.lane.b32.xlu0 %v1175, 112
        %v1291 = vpop.permute.xlu0 %1290
        %1292 = vrot.lane.b32.xlu0 %v1181, 112
        %v1293 = vpop.permute.xlu0 %1292
        %1294 = vrot.lane.b32.xlu0 %v1185, 112
        %v1295 = vpop.permute.xlu0 %1294
        %1296 = vrot.lane.b32.xlu0 %v1191, 112
        %v1297 = vpop.permute.xlu0 %1296
        %1298 = vrot.lane.b32.xlu0 %v1195, 112
        %v1299 = vpop.permute.xlu0 %1298
        %1300 = vrot.lane.b32.xlu0 %v1201, 112
        %v1301 = vpop.permute.xlu0 %1300
        %1302 = vrot.lane.b32.xlu0 %v1205, 112
        %v1303 = vpop.permute.xlu0 %1302
        %vm1304 = vcmp.lt.s32.totalorder %v726, 112
        %v1305 = vsel %vm1304, %v1273, %v1289
        %v1306 = vsel %vm1304, %v1275, %v1291
        %v1307 = vsel %vm1304, %v1277, %v1293
        %v1308 = vsel %vm1304, %v1279, %v1295
        %v1309 = vsel %vm1304, %v1281, %v1297
        %v1310 = vsel %vm1304, %v1283, %v1299
        %v1311 = vsel %vm1304, %v1285, %v1301
        %v1312 = vsel %vm1304, %v1287, %v1303
        %v1313 = vsel %vm1304, %v1289, %v1273
        %v1314 = vsel %vm1304, %v1291, %v1275
        %v1315 = vsel %vm1304, %v1293, %v1277
        %v1316 = vsel %vm1304, %v1295, %v1279
        %v1317 = vsel %vm1304, %v1297, %v1281
        %v1318 = vsel %vm1304, %v1299, %v1283
        %v1319 = vsel %vm1304, %v1301, %v1285
        %v1320 = vsel %vm1304, %v1303, %v1287
        %v1321 = vadd.f32 %v1256, %v1305
        %v1322 = vadd.f32 %v1257, %v1313
        %v1323 = vadd.f32 %v1258, %v1306
        %v1324 = vadd.f32 %v1259, %v1314
        %v1325 = vadd.f32 %v1260, %v1307
        %v1326 = vadd.f32 %v1261, %v1315
        %v1327 = vadd.f32 %v1262, %v1308
        %v1328 = vadd.f32 %v1263, %v1316
        %v1329 = vadd.f32 %v1264, %v1309
        %v1330 = vadd.f32 %v1265, %v1317
        %v1331 = vadd.f32 %v1266, %v1310
        %v1332 = vadd.f32 %v1267, %v1318
        %v1333 = vadd.f32 %v1268, %v1311
        %v1334 = vadd.f32 %v1269, %v1319
        %v1335 = vadd.f32 %v1270, %v1312
        %v1336 = vadd.f32 %v1271, %v1320
        %v1337 = vld [vmem:[%s4] sm:$0xff]
        %v1338 = vld [vmem:[%s4 + $0x8] sm:$0xff]
        %v1339 = vld [vmem:[%s4 + $0x10] sm:$0xff]
        %v1340 = vld [vmem:[%s4 + $0x18] sm:$0xff]
        %v1341 = vld [vmem:[%s4 + $0x20] sm:$0xff]
        %v1342 = vld [vmem:[%s4 + $0x28] sm:$0xff]
        %v1343 = vld [vmem:[%s4 + $0x30] sm:$0xff]
        %v1344 = vld [vmem:[%s4 + $0x38] sm:$0xff]
        %1346 = vset.pattern.permute.xlu0 0
        %1347 = vperm.xlu0 %1346, %v1337
        %v1348 = vpop.permute.xlu0 %1347
        %1351 = vset.pattern.permute.xlu0 0
        %1352 = vperm.xlu0 %1351, %v1338
        %v1353 = vpop.permute.xlu0 %1352
        %1356 = vset.pattern.permute.xlu0 0
        %1357 = vperm.xlu0 %1356, %v1339
        %v1358 = vpop.permute.xlu0 %1357
        %1361 = vset.pattern.permute.xlu0 0
        %1362 = vperm.xlu0 %1361, %v1340
        %v1363 = vpop.permute.xlu0 %1362
        %1366 = vset.pattern.permute.xlu0 0
        %1367 = vperm.xlu0 %1366, %v1341
        %v1368 = vpop.permute.xlu0 %1367
        %1371 = vset.pattern.permute.xlu0 0
        %1372 = vperm.xlu0 %1371, %v1342
        %v1373 = vpop.permute.xlu0 %1372
        %1376 = vset.pattern.permute.xlu0 0
        %1377 = vperm.xlu0 %1376, %v1343
        %v1378 = vpop.permute.xlu0 %1377
        %1381 = vset.pattern.permute.xlu0 0
        %1382 = vperm.xlu0 %1381, %v1344
        %v1383 = vpop.permute.xlu0 %1382
        %v1385 = vmul.f32 %v1321, %v1348
        %v1386 = vmul.f32 %v1322, %v1348
        %v1387 = vmul.f32 %v1323, %v1353
        %v1388 = vmul.f32 %v1324, %v1353
        %v1389 = vmul.f32 %v1325, %v1358
        %v1390 = vmul.f32 %v1326, %v1358
        %v1391 = vmul.f32 %v1327, %v1363
        %v1392 = vmul.f32 %v1328, %v1363
        %v1393 = vmul.f32 %v1329, %v1368
        %v1394 = vmul.f32 %v1330, %v1368
        %v1395 = vmul.f32 %v1331, %v1373
        %v1396 = vmul.f32 %v1332, %v1373
        %v1397 = vmul.f32 %v1333, %v1378
        %v1398 = vmul.f32 %v1334, %v1378
        %v1399 = vmul.f32 %v1335, %v1383
        %v1400 = vmul.f32 %v1336, %v1383
        %v1401 = vld [vmem:[%s5] sm:$0xff]
        %v1402 = vld [vmem:[%s5 + $0x8] sm:$0xff]
        %v1403 = vld [vmem:[%s5 + $0x10] sm:$0xff]
        %v1404 = vld [vmem:[%s5 + $0x18] sm:$0xff]
        %v1405 = vld [vmem:[%s5 + $0x20] sm:$0xff]
        %v1406 = vld [vmem:[%s5 + $0x28] sm:$0xff]
        %v1407 = vld [vmem:[%s5 + $0x30] sm:$0xff]
        %v1408 = vld [vmem:[%s5 + $0x38] sm:$0xff]
        %1410 = vset.pattern.permute.xlu0 0
        %1411 = vperm.xlu0 %1410, %v1401
        %v1412 = vpop.permute.xlu0 %1411
        %1415 = vset.pattern.permute.xlu0 0
        %1416 = vperm.xlu0 %1415, %v1402
        %v1417 = vpop.permute.xlu0 %1416
        %1420 = vset.pattern.permute.xlu0 0
        %1421 = vperm.xlu0 %1420, %v1403
        %v1422 = vpop.permute.xlu0 %1421
        %1425 = vset.pattern.permute.xlu0 0
        %1426 = vperm.xlu0 %1425, %v1404
        %v1427 = vpop.permute.xlu0 %1426
        %1430 = vset.pattern.permute.xlu0 0
        %1431 = vperm.xlu0 %1430, %v1405
        %v1432 = vpop.permute.xlu0 %1431
        %1435 = vset.pattern.permute.xlu0 0
        %1436 = vperm.xlu0 %1435, %v1406
        %v1437 = vpop.permute.xlu0 %1436
        %1440 = vset.pattern.permute.xlu0 0
        %1441 = vperm.xlu0 %1440, %v1407
        %v1442 = vpop.permute.xlu0 %1441
        %1445 = vset.pattern.permute.xlu0 0
        %1446 = vperm.xlu0 %1445, %v1408
        %v1447 = vpop.permute.xlu0 %1446
        %v1449 = vadd.f32 %v1385, %v1412
        %v1450 = vadd.f32 %v1386, %v1412
        %v1451 = vadd.f32 %v1387, %v1417
        %v1452 = vadd.f32 %v1388, %v1417
        %v1453 = vadd.f32 %v1389, %v1422
        %v1454 = vadd.f32 %v1390, %v1422
        %v1455 = vadd.f32 %v1391, %v1427
        %v1456 = vadd.f32 %v1392, %v1427
        %v1457 = vadd.f32 %v1393, %v1432
        %v1458 = vadd.f32 %v1394, %v1432
        %v1459 = vadd.f32 %v1395, %v1437
        %v1460 = vadd.f32 %v1396, %v1437
        %v1461 = vadd.f32 %v1397, %v1442
        %v1462 = vadd.f32 %v1398, %v1442
        %v1463 = vadd.f32 %v1399, %v1447
        %v1464 = vadd.f32 %v1400, %v1447
        %v1465 = vmax.f32 %v1449, 0.0
        %v1466 = vmax.f32 %v1450, 0.0
        %v1467 = vmax.f32 %v1451, 0.0
        %v1468 = vmax.f32 %v1452, 0.0
        %v1469 = vmax.f32 %v1453, 0.0
        %v1470 = vmax.f32 %v1454, 0.0
        %v1471 = vmax.f32 %v1455, 0.0
        %v1472 = vmax.f32 %v1456, 0.0
        %v1473 = vmax.f32 %v1457, 0.0
        %v1474 = vmax.f32 %v1458, 0.0
        %v1475 = vmax.f32 %v1459, 0.0
        %v1476 = vmax.f32 %v1460, 0.0
        %v1477 = vmax.f32 %v1461, 0.0
        %v1478 = vmax.f32 %v1462, 0.0
        %v1479 = vmax.f32 %v1463, 0.0
        %v1480 = vmax.f32 %v1464, 0.0
        %v1482 = vlaneseq
        %v1483 = vshrl.u32 %v1482, 7
        %v1484 = vsub.s32 0, %v1483
        %v1485 = vrot.slane %v425, %v1484
        %v1486 = vlaneseq
        %v1487 = vshrl.u32 %v1486, 7
        %v1488 = vsub.s32 1, %v1487
        %v1489 = vrot.slane %v425, %v1488
        %v1492 = vmul.f32 %v1465, %v1485
        %v1493 = vmul.f32 %v1466, %v1489
        %v1494 = vmul.f32 %v1467, %v1485
        %v1495 = vmul.f32 %v1468, %v1489
        %v1496 = vmul.f32 %v1469, %v1485
        %v1497 = vmul.f32 %v1470, %v1489
        %v1498 = vmul.f32 %v1471, %v1485
        %v1499 = vmul.f32 %v1472, %v1489
        %v1500 = vmul.f32 %v1473, %v1485
        %v1501 = vmul.f32 %v1474, %v1489
        %v1502 = vmul.f32 %v1475, %v1485
        %v1503 = vmul.f32 %v1476, %v1489
        %v1504 = vmul.f32 %v1477, %v1485
        %v1505 = vmul.f32 %v1478, %v1489
        %v1506 = vmul.f32 %v1479, %v1485
        %v1507 = vmul.f32 %v1480, %v1489
        %1508 = vrot.lane.b32.xlu0 %v1492, 1
        %v1509 = vpop.permute.xlu0 %1508
        %1510 = vrot.lane.b32.xlu0 %v1494, 1
        %v1511 = vpop.permute.xlu0 %1510
        %1512 = vrot.lane.b32.xlu0 %v1496, 1
        %v1513 = vpop.permute.xlu0 %1512
        %1514 = vrot.lane.b32.xlu0 %v1498, 1
        %v1515 = vpop.permute.xlu0 %1514
        %1516 = vrot.lane.b32.xlu0 %v1500, 1
        %v1517 = vpop.permute.xlu0 %1516
        %1518 = vrot.lane.b32.xlu0 %v1502, 1
        %v1519 = vpop.permute.xlu0 %1518
        %1520 = vrot.lane.b32.xlu0 %v1504, 1
        %v1521 = vpop.permute.xlu0 %1520
        %1522 = vrot.lane.b32.xlu0 %v1506, 1
        %v1523 = vpop.permute.xlu0 %1522
        %1524 = vrot.lane.b32.xlu0 %v1493, 1
        %v1525 = vpop.permute.xlu0 %1524
        %1526 = vrot.lane.b32.xlu0 %v1495, 1
        %v1527 = vpop.permute.xlu0 %1526
        %1528 = vrot.lane.b32.xlu0 %v1497, 1
        %v1529 = vpop.permute.xlu0 %1528
        %1530 = vrot.lane.b32.xlu0 %v1499, 1
        %v1531 = vpop.permute.xlu0 %1530
        %1532 = vrot.lane.b32.xlu0 %v1501, 1
        %v1533 = vpop.permute.xlu0 %1532
        %1534 = vrot.lane.b32.xlu0 %v1503, 1
        %v1535 = vpop.permute.xlu0 %1534
        %1536 = vrot.lane.b32.xlu0 %v1505, 1
        %v1537 = vpop.permute.xlu0 %1536
        %1538 = vrot.lane.b32.xlu0 %v1507, 1
        %v1539 = vpop.permute.xlu0 %1538
        %v1540 = vsel %vm727, %v1509, %v1525
        %v1541 = vsel %vm727, %v1511, %v1527
        %v1542 = vsel %vm727, %v1513, %v1529
        %v1543 = vsel %vm727, %v1515, %v1531
        %v1544 = vsel %vm727, %v1517, %v1533
        %v1545 = vsel %vm727, %v1519, %v1535
        %v1546 = vsel %vm727, %v1521, %v1537
        %v1547 = vsel %vm727, %v1523, %v1539
        %v1548 = vsel %vm727, %v1525, %v1509
        %v1549 = vsel %vm727, %v1527, %v1511
        %v1550 = vsel %vm727, %v1529, %v1513
        %v1551 = vsel %vm727, %v1531, %v1515
        %v1552 = vsel %vm727, %v1533, %v1517
        %v1553 = vsel %vm727, %v1535, %v1519
        %v1554 = vsel %vm727, %v1537, %v1521
        %v1555 = vsel %vm727, %v1539, %v1523
        %1556 = vrot.lane.b32.xlu0 %v1492, 127
        %v1557 = vpop.permute.xlu0 %1556
        %1558 = vrot.lane.b32.xlu0 %v1494, 127
        %v1559 = vpop.permute.xlu0 %1558
        %1560 = vrot.lane.b32.xlu0 %v1496, 127
        %v1561 = vpop.permute.xlu0 %1560
        %1562 = vrot.lane.b32.xlu0 %v1498, 127
        %v1563 = vpop.permute.xlu0 %1562
        %1564 = vrot.lane.b32.xlu0 %v1500, 127
        %v1565 = vpop.permute.xlu0 %1564
        %1566 = vrot.lane.b32.xlu0 %v1502, 127
        %v1567 = vpop.permute.xlu0 %1566
        %1568 = vrot.lane.b32.xlu0 %v1504, 127
        %v1569 = vpop.permute.xlu0 %1568
        %1570 = vrot.lane.b32.xlu0 %v1506, 127
        %v1571 = vpop.permute.xlu0 %1570
        %1572 = vrot.lane.b32.xlu0 %v1493, 127
        %v1573 = vpop.permute.xlu0 %1572
        %1574 = vrot.lane.b32.xlu0 %v1495, 127
        %v1575 = vpop.permute.xlu0 %1574
        %1576 = vrot.lane.b32.xlu0 %v1497, 127
        %v1577 = vpop.permute.xlu0 %1576
        %1578 = vrot.lane.b32.xlu0 %v1499, 127
        %v1579 = vpop.permute.xlu0 %1578
        %1580 = vrot.lane.b32.xlu0 %v1501, 127
        %v1581 = vpop.permute.xlu0 %1580
        %1582 = vrot.lane.b32.xlu0 %v1503, 127
        %v1583 = vpop.permute.xlu0 %1582
        %1584 = vrot.lane.b32.xlu0 %v1505, 127
        %v1585 = vpop.permute.xlu0 %1584
        %1586 = vrot.lane.b32.xlu0 %v1507, 127
        %v1587 = vpop.permute.xlu0 %1586
        %v1588 = vsel %vm776, %v1557, %v1573
        %v1589 = vsel %vm776, %v1559, %v1575
        %v1590 = vsel %vm776, %v1561, %v1577
        %v1591 = vsel %vm776, %v1563, %v1579
        %v1592 = vsel %vm776, %v1565, %v1581
        %v1593 = vsel %vm776, %v1567, %v1583
        %v1594 = vsel %vm776, %v1569, %v1585
        %v1595 = vsel %vm776, %v1571, %v1587
        %v1596 = vsel %vm776, %v1573, %v1557
        %v1597 = vsel %vm776, %v1575, %v1559
        %v1598 = vsel %vm776, %v1577, %v1561
        %v1599 = vsel %vm776, %v1579, %v1563
        %v1600 = vsel %vm776, %v1581, %v1565
        %v1601 = vsel %vm776, %v1583, %v1567
        %v1602 = vsel %vm776, %v1585, %v1569
        %v1603 = vsel %vm776, %v1587, %v1571
        %v1604 = vpack.c.bf16 %v1549, %v1548
        %v1605 = vpack.c.bf16 %v1541, %v1540
        %v1606 = vpack.c.bf16 %v1551, %v1550
        %v1607 = vpack.c.bf16 %v1543, %v1542
        %v1608 = vpack.c.bf16 %v1553, %v1552
        %v1609 = vpack.c.bf16 %v1545, %v1544
        %v1610 = vpack.c.bf16 %v1555, %v1554
        %v1611 = vpack.c.bf16 %v1547, %v1546
        %v1612 = vpack.c.bf16 %v1494, %v1492
        %v1613 = vpack.c.bf16 %v1495, %v1493
        %v1614 = vpack.c.bf16 %v1498, %v1496
        %v1615 = vpack.c.bf16 %v1499, %v1497
        %v1616 = vpack.c.bf16 %v1502, %v1500
        %v1617 = vpack.c.bf16 %v1503, %v1501
        %v1618 = vpack.c.bf16 %v1506, %v1504
        %v1619 = vpack.c.bf16 %v1507, %v1505
        %v1620 = vpack.c.bf16 %v1589, %v1588
        %v1621 = vpack.c.bf16 %v1597, %v1596
        %v1622 = vpack.c.bf16 %v1591, %v1590
        %v1623 = vpack.c.bf16 %v1599, %v1598
        %v1624 = vpack.c.bf16 %v1593, %v1592
        %v1625 = vpack.c.bf16 %v1601, %v1600
        %v1626 = vpack.c.bf16 %v1595, %v1594
        %v1627 = vpack.c.bf16 %v1603, %v1602
        %v1628 = vld [vmem:[%s6] sm:$0xff]
        %v1629 = vld [vmem:[%s6 + $0x8] sm:$0xff]
        %v1630 = vld [vmem:[%s6 + $0x10] sm:$0xff]
        %v1631 = vld [vmem:[%s6 + $0x18] sm:$0xff]
        %v1632 = vld [vmem:[%s6 + $0x20] sm:$0xff]
        %v1633 = vld [vmem:[%s6 + $0x28] sm:$0xff]
        %v1634 = vld [vmem:[%s6 + $0x30] sm:$0xff]
        %v1635 = vld [vmem:[%s6 + $0x38] sm:$0xff]
        %v1644 = vunpack.c.l.b16 %v1628
        %v1645 = vunpack.c.h.b16 %v1628
        %v1646 = vunpack.c.l.b16 %v1629
        %v1647 = vunpack.c.h.b16 %v1629
        %v1648 = vunpack.c.l.b16 %v1630
        %v1649 = vunpack.c.h.b16 %v1630
        %v1650 = vunpack.c.l.b16 %v1631
        %v1651 = vunpack.c.h.b16 %v1631
        %v1652 = vunpack.c.l.b16 %v1632
        %v1653 = vunpack.c.h.b16 %v1632
        %v1654 = vunpack.c.l.b16 %v1633
        %v1655 = vunpack.c.h.b16 %v1633
        %v1656 = vunpack.c.l.b16 %v1634
        %v1657 = vunpack.c.h.b16 %v1634
        %v1658 = vunpack.c.l.b16 %v1635
        %v1659 = vunpack.c.h.b16 %v1635
        %v1660 = vpack.c.b16 %v1646, %v1644
        %v1661 = vpack.c.b16 %v1647, %v1645
        %v1662 = vpack.c.b16 %v1650, %v1648
        %v1663 = vpack.c.b16 %v1651, %v1649
        %v1664 = vpack.c.b16 %v1654, %v1652
        %v1665 = vpack.c.b16 %v1655, %v1653
        %v1666 = vpack.c.b16 %v1658, %v1656
        %v1667 = vpack.c.b16 %v1659, %v1657
        %v1673 = vsel %vm861, %v1661, 0
        %v1676 = vsel %vm861, %v1663, 0
        %v1679 = vsel %vm861, %v1665, 0
        %v1682 = vsel %vm861, %v1667, 0
        %1684 = vmatprep.subr.bf16.mxu0 %v1619
        %1685 = vmatpush1.bf16.msra.mxu0 %v1618
        %1686 = vmatprep.subr.bf16.mxu0 %v1617
        %1687 = vmatpush1.bf16.msra.mxu0 %v1616
        %1688 = vmatprep.subr.bf16.mxu0 %v1615
        %1689 = vmatpush1.bf16.msra.mxu0 %v1614
        %1690 = vmatprep.subr.bf16.mxu0 %v1613
        %1691 = vmatpush1.bf16.msra.mxu0 %v1612
        %1692 = vmatprep.subr.bf16.mxu0 %v1611
        %1693 = vmatpush1.bf16.msra.mxu0 %v1610
        %1694 = vmatprep.subr.bf16.mxu0 %v1609
        %1695 = vmatpush1.bf16.msra.mxu0 %v1608
        %1696 = vmatprep.subr.bf16.mxu0 %v1607
        %1697 = vmatpush1.bf16.msra.mxu0 %v1606
        %1698 = vmatprep.subr.bf16.mxu0 %v1605
        %1699 = vmatpush1.bf16.msra.mxu0 %v1604
        %1700 = vmatprep.subr.bf16.mxu0 0
        %1701 = vmatpush2.bf16.msra.mxu0 0
        %1702 = vmatprep.subr.bf16.mxu0 0
        %1703 = vmatpush2.bf16.msra.mxu0 0
        %1704 = vmatprep.subr.bf16.mxu0 0
        %1705 = vmatpush2.bf16.msra.mxu0 0
        %1706 = vmatprep.subr.bf16.mxu0 0
        %1707 = vmatpush2.bf16.msra.mxu0 0
        %1708 = vmatprep.subr.bf16.mxu0 %v1627
        %1709 = vmatpush2.bf16.msra.mxu0 %v1626
        %1710 = vmatprep.subr.bf16.mxu0 %v1625
        %1711 = vmatpush2.bf16.msra.mxu0 %v1624
        %1712 = vmatprep.subr.bf16.mxu0 %v1623
        %1713 = vmatpush2.bf16.msra.mxu0 %v1622
        %1714 = vmatprep.subr.bf16.mxu0 %v1621
        %1715 = vmatpush2.bf16.msra.mxu0 %v1620
        %1716 = vmatprep.mubr.bf16.mxu0 %v1673
        %1717 = vmatmul.mubr.bf16.gmra.mxu0 %v1660
        %v1718 = vpop.f32.mrf.mxu0
        %v1719 = vadd.f32 0.0, %v1718
        %v1720 = vpop.f32.mrf.mxu0
        %v1721 = vadd.f32 0.0, %v1720
        %v1722 = vpop.f32.mrf.mxu0
        %v1723 = vadd.f32 0.0, %v1722
        %v1724 = vpop.f32.mrf.mxu0
        %v1725 = vadd.f32 0.0, %v1724
        %1726 = vmatprep.mubr.bf16.mxu0 %v1676
        %1727 = vmatmul.mubr.bf16.gmra.mxu0 %v1662
        %v1728 = vpop.f32.mrf.mxu0
        %v1729 = vadd.f32 0.0, %v1728
        %v1730 = vpop.f32.mrf.mxu0
        %v1731 = vadd.f32 0.0, %v1730
        %v1732 = vpop.f32.mrf.mxu0
        %v1733 = vadd.f32 0.0, %v1732
        %v1734 = vpop.f32.mrf.mxu0
        %v1735 = vadd.f32 0.0, %v1734
        %1736 = vmatprep.mubr.bf16.mxu0 %v1679
        %1737 = vmatmul.mubr.bf16.gmra.mxu0 %v1664
        %v1738 = vpop.f32.mrf.mxu0
        %v1739 = vadd.f32 0.0, %v1738
        %v1740 = vpop.f32.mrf.mxu0
        %v1741 = vadd.f32 0.0, %v1740
        %v1742 = vpop.f32.mrf.mxu0
        %v1743 = vadd.f32 0.0, %v1742
        %v1744 = vpop.f32.mrf.mxu0
        %v1745 = vadd.f32 0.0, %v1744
        %1746 = vmatprep.mubr.bf16.mxu0 %v1682
        %1747 = vmatmul.mubr.bf16.gmra.mxu0 %v1666
        %v1748 = vpop.f32.mrf.mxu0
        %v1749 = vadd.f32 0.0, %v1748
        %v1750 = vpop.f32.mrf.mxu0
        %v1751 = vadd.f32 0.0, %v1750
        %v1752 = vpop.f32.mrf.mxu0
        %v1753 = vadd.f32 0.0, %v1752
        %v1754 = vpop.f32.mrf.mxu0
        %v1755 = vadd.f32 0.0, %v1754
        %1756 = vdwg.mxu0
        %s1757 = scalar_lea.vmem %s6, 64
        %v1758 = vld [vmem:[%s1757] sm:$0xff]
        %v1759 = vld [vmem:[%s1757 + $0x8] sm:$0xff]
        %v1760 = vld [vmem:[%s1757 + $0x10] sm:$0xff]
        %v1761 = vld [vmem:[%s1757 + $0x18] sm:$0xff]
        %v1762 = vld [vmem:[%s1757 + $0x20] sm:$0xff]
        %v1763 = vld [vmem:[%s1757 + $0x28] sm:$0xff]
        %v1764 = vld [vmem:[%s1757 + $0x30] sm:$0xff]
        %v1765 = vld [vmem:[%s1757 + $0x38] sm:$0xff]
        %v1774 = vunpack.c.l.b16 %v1758
        %v1775 = vunpack.c.h.b16 %v1758
        %v1776 = vunpack.c.l.b16 %v1759
        %v1777 = vunpack.c.h.b16 %v1759
        %v1778 = vunpack.c.l.b16 %v1760
        %v1779 = vunpack.c.h.b16 %v1760
        %v1780 = vunpack.c.l.b16 %v1761
        %v1781 = vunpack.c.h.b16 %v1761
        %v1782 = vunpack.c.l.b16 %v1762
        %v1783 = vunpack.c.h.b16 %v1762
        %v1784 = vunpack.c.l.b16 %v1763
        %v1785 = vunpack.c.h.b16 %v1763
        %v1786 = vunpack.c.l.b16 %v1764
        %v1787 = vunpack.c.h.b16 %v1764
        %v1788 = vunpack.c.l.b16 %v1765
        %v1789 = vunpack.c.h.b16 %v1765
        %v1790 = vpack.c.b16 %v1776, %v1774
        %v1791 = vpack.c.b16 %v1777, %v1775
        %v1792 = vpack.c.b16 %v1780, %v1778
        %v1793 = vpack.c.b16 %v1781, %v1779
        %v1794 = vpack.c.b16 %v1784, %v1782
        %v1795 = vpack.c.b16 %v1785, %v1783
        %v1796 = vpack.c.b16 %v1788, %v1786
        %v1797 = vpack.c.b16 %v1789, %v1787
        %v1803 = vsel %vm861, %v1791, 0
        %v1806 = vsel %vm861, %v1793, 0
        %v1809 = vsel %vm861, %v1795, 0
        %v1812 = vsel %vm861, %v1797, 0
        %1814 = vmatprep.subr.bf16.mxu0 %v1619
        %1815 = vmatpush1.bf16.msra.mxu0 %v1618
        %1816 = vmatprep.subr.bf16.mxu0 %v1617
        %1817 = vmatpush1.bf16.msra.mxu0 %v1616
        %1818 = vmatprep.subr.bf16.mxu0 %v1615
        %1819 = vmatpush1.bf16.msra.mxu0 %v1614
        %1820 = vmatprep.subr.bf16.mxu0 %v1613
        %1821 = vmatpush1.bf16.msra.mxu0 %v1612
        %1822 = vmatprep.subr.bf16.mxu0 %v1611
        %1823 = vmatpush1.bf16.msra.mxu0 %v1610
        %1824 = vmatprep.subr.bf16.mxu0 %v1609
        %1825 = vmatpush1.bf16.msra.mxu0 %v1608
        %1826 = vmatprep.subr.bf16.mxu0 %v1607
        %1827 = vmatpush1.bf16.msra.mxu0 %v1606
        %1828 = vmatprep.subr.bf16.mxu0 %v1605
        %1829 = vmatpush1.bf16.msra.mxu0 %v1604
        %1830 = vmatprep.subr.bf16.mxu0 0
        %1831 = vmatpush2.bf16.msra.mxu0 0
        %1832 = vmatprep.subr.bf16.mxu0 0
        %1833 = vmatpush2.bf16.msra.mxu0 0
        %1834 = vmatprep.subr.bf16.mxu0 0
        %1835 = vmatpush2.bf16.msra.mxu0 0
        %1836 = vmatprep.subr.bf16.mxu0 0
        %1837 = vmatpush2.bf16.msra.mxu0 0
        %1838 = vmatprep.subr.bf16.mxu0 %v1627
        %1839 = vmatpush2.bf16.msra.mxu0 %v1626
        %1840 = vmatprep.subr.bf16.mxu0 %v1625
        %1841 = vmatpush2.bf16.msra.mxu0 %v1624
        %1842 = vmatprep.subr.bf16.mxu0 %v1623
        %1843 = vmatpush2.bf16.msra.mxu0 %v1622
        %1844 = vmatprep.subr.bf16.mxu0 %v1621
        %1845 = vmatpush2.bf16.msra.mxu0 %v1620
        %1846 = vmatprep.mubr.bf16.mxu0 %v1803
        %1847 = vmatmul.mubr.bf16.gmra.mxu0 %v1790
        %v1848 = vpop.f32.mrf.mxu0
        %v1849 = vadd.f32 0.0, %v1848
        %v1850 = vpop.f32.mrf.mxu0
        %v1851 = vadd.f32 0.0, %v1850
        %v1852 = vpop.f32.mrf.mxu0
        %v1853 = vadd.f32 0.0, %v1852
        %v1854 = vpop.f32.mrf.mxu0
        %v1855 = vadd.f32 0.0, %v1854
        %1856 = vmatprep.mubr.bf16.mxu0 %v1806
        %1857 = vmatmul.mubr.bf16.gmra.mxu0 %v1792
        %v1858 = vpop.f32.mrf.mxu0
        %v1859 = vadd.f32 0.0, %v1858
        %v1860 = vpop.f32.mrf.mxu0
        %v1861 = vadd.f32 0.0, %v1860
        %v1862 = vpop.f32.mrf.mxu0
        %v1863 = vadd.f32 0.0, %v1862
        %v1864 = vpop.f32.mrf.mxu0
        %v1865 = vadd.f32 0.0, %v1864
        %1866 = vmatprep.mubr.bf16.mxu0 %v1809
        %1867 = vmatmul.mubr.bf16.gmra.mxu0 %v1794
        %v1868 = vpop.f32.mrf.mxu0
        %v1869 = vadd.f32 0.0, %v1868
        %v1870 = vpop.f32.mrf.mxu0
        %v1871 = vadd.f32 0.0, %v1870
        %v1872 = vpop.f32.mrf.mxu0
        %v1873 = vadd.f32 0.0, %v1872
        %v1874 = vpop.f32.mrf.mxu0
        %v1875 = vadd.f32 0.0, %v1874
        %1876 = vmatprep.mubr.bf16.mxu0 %v1812
        %1877 = vmatmul.mubr.bf16.gmra.mxu0 %v1796
        %v1878 = vpop.f32.mrf.mxu0
        %v1879 = vadd.f32 0.0, %v1878
        %v1880 = vpop.f32.mrf.mxu0
        %v1881 = vadd.f32 0.0, %v1880
        %v1882 = vpop.f32.mrf.mxu0
        %v1883 = vadd.f32 0.0, %v1882
        %v1884 = vpop.f32.mrf.mxu0
        %v1885 = vadd.f32 0.0, %v1884
        %1886 = vdwg.mxu0
        %s1887 = scalar_lea.vmem %s6, 128
        %v1888 = vld [vmem:[%s1887] sm:$0xff]
        %v1889 = vld [vmem:[%s1887 + $0x8] sm:$0xff]
        %v1890 = vld [vmem:[%s1887 + $0x10] sm:$0xff]
        %v1891 = vld [vmem:[%s1887 + $0x18] sm:$0xff]
        %v1892 = vld [vmem:[%s1887 + $0x20] sm:$0xff]
        %v1893 = vld [vmem:[%s1887 + $0x28] sm:$0xff]
        %v1894 = vld [vmem:[%s1887 + $0x30] sm:$0xff]
        %v1895 = vld [vmem:[%s1887 + $0x38] sm:$0xff]
        %v1904 = vunpack.c.l.b16 %v1888
        %v1905 = vunpack.c.h.b16 %v1888
        %v1906 = vunpack.c.l.b16 %v1889
        %v1907 = vunpack.c.h.b16 %v1889
        %v1908 = vunpack.c.l.b16 %v1890
        %v1909 = vunpack.c.h.b16 %v1890
        %v1910 = vunpack.c.l.b16 %v1891
        %v1911 = vunpack.c.h.b16 %v1891
        %v1912 = vunpack.c.l.b16 %v1892
        %v1913 = vunpack.c.h.b16 %v1892
        %v1914 = vunpack.c.l.b16 %v1893
        %v1915 = vunpack.c.h.b16 %v1893
        %v1916 = vunpack.c.l.b16 %v1894
        %v1917 = vunpack.c.h.b16 %v1894
        %v1918 = vunpack.c.l.b16 %v1895
        %v1919 = vunpack.c.h.b16 %v1895
        %v1920 = vpack.c.b16 %v1906, %v1904
        %v1921 = vpack.c.b16 %v1907, %v1905
        %v1922 = vpack.c.b16 %v1910, %v1908
        %v1923 = vpack.c.b16 %v1911, %v1909
        %v1924 = vpack.c.b16 %v1914, %v1912
        %v1925 = vpack.c.b16 %v1915, %v1913
        %v1926 = vpack.c.b16 %v1918, %v1916
        %v1927 = vpack.c.b16 %v1919, %v1917
        %v1933 = vsel %vm861, %v1921, 0
        %v1936 = vsel %vm861, %v1923, 0
        %v1939 = vsel %vm861, %v1925, 0
        %v1942 = vsel %vm861, %v1927, 0
        %1944 = vmatprep.subr.bf16.mxu0 %v1619
        %1945 = vmatpush1.bf16.msra.mxu0 %v1618
        %1946 = vmatprep.subr.bf16.mxu0 %v1617
        %1947 = vmatpush1.bf16.msra.mxu0 %v1616
        %1948 = vmatprep.subr.bf16.mxu0 %v1615
        %1949 = vmatpush1.bf16.msra.mxu0 %v1614
        %1950 = vmatprep.subr.bf16.mxu0 %v1613
        %1951 = vmatpush1.bf16.msra.mxu0 %v1612
        %1952 = vmatprep.subr.bf16.mxu0 %v1611
        %1953 = vmatpush1.bf16.msra.mxu0 %v1610
        %1954 = vmatprep.subr.bf16.mxu0 %v1609
        %1955 = vmatpush1.bf16.msra.mxu0 %v1608
        %1956 = vmatprep.subr.bf16.mxu0 %v1607
        %1957 = vmatpush1.bf16.msra.mxu0 %v1606
        %1958 = vmatprep.subr.bf16.mxu0 %v1605
        %1959 = vmatpush1.bf16.msra.mxu0 %v1604
        %1960 = vmatprep.subr.bf16.mxu0 0
        %1961 = vmatpush2.bf16.msra.mxu0 0
        %1962 = vmatprep.subr.bf16.mxu0 0
        %1963 = vmatpush2.bf16.msra.mxu0 0
        %1964 = vmatprep.subr.bf16.mxu0 0
        %1965 = vmatpush2.bf16.msra.mxu0 0
        %1966 = vmatprep.subr.bf16.mxu0 0
        %1967 = vmatpush2.bf16.msra.mxu0 0
        %1968 = vmatprep.subr.bf16.mxu0 %v1627
        %1969 = vmatpush2.bf16.msra.mxu0 %v1626
        %1970 = vmatprep.subr.bf16.mxu0 %v1625
        %1971 = vmatpush2.bf16.msra.mxu0 %v1624
        %1972 = vmatprep.subr.bf16.mxu0 %v1623
        %1973 = vmatpush2.bf16.msra.mxu0 %v1622
        %1974 = vmatprep.subr.bf16.mxu0 %v1621
        %1975 = vmatpush2.bf16.msra.mxu0 %v1620
        %1976 = vmatprep.mubr.bf16.mxu0 %v1933
        %1977 = vmatmul.mubr.bf16.gmra.mxu0 %v1920
        %v1978 = vpop.f32.mrf.mxu0
        %v1979 = vadd.f32 0.0, %v1978
        %v1980 = vpop.f32.mrf.mxu0
        %v1981 = vadd.f32 0.0, %v1980
        %v1982 = vpop.f32.mrf.mxu0
        %v1983 = vadd.f32 0.0, %v1982
        %v1984 = vpop.f32.mrf.mxu0
        %v1985 = vadd.f32 0.0, %v1984
        %1986 = vmatprep.mubr.bf16.mxu0 %v1936
        %1987 = vmatmul.mubr.bf16.gmra.mxu0 %v1922
        %v1988 = vpop.f32.mrf.mxu0
        %v1989 = vadd.f32 0.0, %v1988
        %v1990 = vpop.f32.mrf.mxu0
        %v1991 = vadd.f32 0.0, %v1990
        %v1992 = vpop.f32.mrf.mxu0
        %v1993 = vadd.f32 0.0, %v1992
        %v1994 = vpop.f32.mrf.mxu0
        %v1995 = vadd.f32 0.0, %v1994
        %1996 = vmatprep.mubr.bf16.mxu0 %v1939
        %1997 = vmatmul.mubr.bf16.gmra.mxu0 %v1924
        %v1998 = vpop.f32.mrf.mxu0
        %v1999 = vadd.f32 0.0, %v1998
        %v2000 = vpop.f32.mrf.mxu0
        %v2001 = vadd.f32 0.0, %v2000
        %v2002 = vpop.f32.mrf.mxu0
        %v2003 = vadd.f32 0.0, %v2002
        %v2004 = vpop.f32.mrf.mxu0
        %v2005 = vadd.f32 0.0, %v2004
        %2006 = vmatprep.mubr.bf16.mxu0 %v1942
        %2007 = vmatmul.mubr.bf16.gmra.mxu0 %v1926
        %v2008 = vpop.f32.mrf.mxu0
        %v2009 = vadd.f32 0.0, %v2008
        %v2010 = vpop.f32.mrf.mxu0
        %v2011 = vadd.f32 0.0, %v2010
        %v2012 = vpop.f32.mrf.mxu0
        %v2013 = vadd.f32 0.0, %v2012
        %v2014 = vpop.f32.mrf.mxu0
        %v2015 = vadd.f32 0.0, %v2014
        %2016 = vdwg.mxu0
        %2017 = vrot.lane.b32.xlu0 %v1719, 16
        %v2018 = vpop.permute.xlu0 %2017
        %2019 = vrot.lane.b32.xlu0 %v1723, 16
        %v2020 = vpop.permute.xlu0 %2019
        %2021 = vrot.lane.b32.xlu0 %v1729, 16
        %v2022 = vpop.permute.xlu0 %2021
        %2023 = vrot.lane.b32.xlu0 %v1733, 16
        %v2024 = vpop.permute.xlu0 %2023
        %2025 = vrot.lane.b32.xlu0 %v1739, 16
        %v2026 = vpop.permute.xlu0 %2025
        %2027 = vrot.lane.b32.xlu0 %v1743, 16
        %v2028 = vpop.permute.xlu0 %2027
        %2029 = vrot.lane.b32.xlu0 %v1749, 16
        %v2030 = vpop.permute.xlu0 %2029
        %2031 = vrot.lane.b32.xlu0 %v1753, 16
        %v2032 = vpop.permute.xlu0 %2031
        %2033 = vrot.lane.b32.xlu0 %v1721, 16
        %v2034 = vpop.permute.xlu0 %2033
        %2035 = vrot.lane.b32.xlu0 %v1725, 16
        %v2036 = vpop.permute.xlu0 %2035
        %2037 = vrot.lane.b32.xlu0 %v1731, 16
        %v2038 = vpop.permute.xlu0 %2037
        %2039 = vrot.lane.b32.xlu0 %v1735, 16
        %v2040 = vpop.permute.xlu0 %2039
        %2041 = vrot.lane.b32.xlu0 %v1741, 16
        %v2042 = vpop.permute.xlu0 %2041
        %2043 = vrot.lane.b32.xlu0 %v1745, 16
        %v2044 = vpop.permute.xlu0 %2043
        %2045 = vrot.lane.b32.xlu0 %v1751, 16
        %v2046 = vpop.permute.xlu0 %2045
        %2047 = vrot.lane.b32.xlu0 %v1755, 16
        %v2048 = vpop.permute.xlu0 %2047
        %v2049 = vsel %vm1239, %v2018, %v2034
        %v2050 = vsel %vm1239, %v2020, %v2036
        %v2051 = vsel %vm1239, %v2022, %v2038
        %v2052 = vsel %vm1239, %v2024, %v2040
        %v2053 = vsel %vm1239, %v2026, %v2042
        %v2054 = vsel %vm1239, %v2028, %v2044
        %v2055 = vsel %vm1239, %v2030, %v2046
        %v2056 = vsel %vm1239, %v2032, %v2048
        %v2057 = vsel %vm1239, %v2034, %v2018
        %v2058 = vsel %vm1239, %v2036, %v2020
        %v2059 = vsel %vm1239, %v2038, %v2022
        %v2060 = vsel %vm1239, %v2040, %v2024
        %v2061 = vsel %vm1239, %v2042, %v2026
        %v2062 = vsel %vm1239, %v2044, %v2028
        %v2063 = vsel %vm1239, %v2046, %v2030
        %v2064 = vsel %vm1239, %v2048, %v2032
        %v2065 = vadd.f32 %v2057, %v1849
        %v2066 = vadd.f32 %v2049, %v1851
        %v2067 = vadd.f32 %v2058, %v1853
        %v2068 = vadd.f32 %v2050, %v1855
        %v2069 = vadd.f32 %v2059, %v1859
        %v2070 = vadd.f32 %v2051, %v1861
        %v2071 = vadd.f32 %v2060, %v1863
        %v2072 = vadd.f32 %v2052, %v1865
        %v2073 = vadd.f32 %v2061, %v1869
        %v2074 = vadd.f32 %v2053, %v1871
        %v2075 = vadd.f32 %v2062, %v1873
        %v2076 = vadd.f32 %v2054, %v1875
        %v2077 = vadd.f32 %v2063, %v1879
        %v2078 = vadd.f32 %v2055, %v1881
        %v2079 = vadd.f32 %v2064, %v1883
        %v2080 = vadd.f32 %v2056, %v1885
        %2081 = vrot.lane.b32.xlu0 %v1979, 112
        %v2082 = vpop.permute.xlu0 %2081
        %2083 = vrot.lane.b32.xlu0 %v1983, 112
        %v2084 = vpop.permute.xlu0 %2083
        %2085 = vrot.lane.b32.xlu0 %v1989, 112
        %v2086 = vpop.permute.xlu0 %2085
        %2087 = vrot.lane.b32.xlu0 %v1993, 112
        %v2088 = vpop.permute.xlu0 %2087
        %2089 = vrot.lane.b32.xlu0 %v1999, 112
        %v2090 = vpop.permute.xlu0 %2089
        %2091 = vrot.lane.b32.xlu0 %v2003, 112
        %v2092 = vpop.permute.xlu0 %2091
        %2093 = vrot.lane.b32.xlu0 %v2009, 112
        %v2094 = vpop.permute.xlu0 %2093
        %2095 = vrot.lane.b32.xlu0 %v2013, 112
        %v2096 = vpop.permute.xlu0 %2095
        %2097 = vrot.lane.b32.xlu0 %v1981, 112
        %v2098 = vpop.permute.xlu0 %2097
        %2099 = vrot.lane.b32.xlu0 %v1985, 112
        %v2100 = vpop.permute.xlu0 %2099
        %2101 = vrot.lane.b32.xlu0 %v1991, 112
        %v2102 = vpop.permute.xlu0 %2101
        %2103 = vrot.lane.b32.xlu0 %v1995, 112
        %v2104 = vpop.permute.xlu0 %2103
        %2105 = vrot.lane.b32.xlu0 %v2001, 112
        %v2106 = vpop.permute.xlu0 %2105
        %2107 = vrot.lane.b32.xlu0 %v2005, 112
        %v2108 = vpop.permute.xlu0 %2107
        %2109 = vrot.lane.b32.xlu0 %v2011, 112
        %v2110 = vpop.permute.xlu0 %2109
        %2111 = vrot.lane.b32.xlu0 %v2015, 112
        %v2112 = vpop.permute.xlu0 %2111
        %v2113 = vsel %vm1304, %v2082, %v2098
        %v2114 = vsel %vm1304, %v2084, %v2100
        %v2115 = vsel %vm1304, %v2086, %v2102
        %v2116 = vsel %vm1304, %v2088, %v2104
        %v2117 = vsel %vm1304, %v2090, %v2106
        %v2118 = vsel %vm1304, %v2092, %v2108
        %v2119 = vsel %vm1304, %v2094, %v2110
        %v2120 = vsel %vm1304, %v2096, %v2112
        %v2121 = vsel %vm1304, %v2098, %v2082
        %v2122 = vsel %vm1304, %v2100, %v2084
        %v2123 = vsel %vm1304, %v2102, %v2086
        %v2124 = vsel %vm1304, %v2104, %v2088
        %v2125 = vsel %vm1304, %v2106, %v2090
        %v2126 = vsel %vm1304, %v2108, %v2092
        %v2127 = vsel %vm1304, %v2110, %v2094
        %v2128 = vsel %vm1304, %v2112, %v2096
        %v2129 = vadd.f32 %v2065, %v2113
        %v2130 = vadd.f32 %v2066, %v2121
        %v2131 = vadd.f32 %v2067, %v2114
        %v2132 = vadd.f32 %v2068, %v2122
        %v2133 = vadd.f32 %v2069, %v2115
        %v2134 = vadd.f32 %v2070, %v2123
        %v2135 = vadd.f32 %v2071, %v2116
        %v2136 = vadd.f32 %v2072, %v2124
        %v2137 = vadd.f32 %v2073, %v2117
        %v2138 = vadd.f32 %v2074, %v2125
        %v2139 = vadd.f32 %v2075, %v2118
        %v2140 = vadd.f32 %v2076, %v2126
        %v2141 = vadd.f32 %v2077, %v2119
        %v2142 = vadd.f32 %v2078, %v2127
        %v2143 = vadd.f32 %v2079, %v2120
        %v2144 = vadd.f32 %v2080, %v2128
        %v2145 = vld [vmem:[%s7] sm:$0xff]
        %v2146 = vld [vmem:[%s7 + $0x8] sm:$0xff]
        %v2147 = vld [vmem:[%s7 + $0x10] sm:$0xff]
        %v2148 = vld [vmem:[%s7 + $0x18] sm:$0xff]
        %v2149 = vld [vmem:[%s7 + $0x20] sm:$0xff]
        %v2150 = vld [vmem:[%s7 + $0x28] sm:$0xff]
        %v2151 = vld [vmem:[%s7 + $0x30] sm:$0xff]
        %v2152 = vld [vmem:[%s7 + $0x38] sm:$0xff]
        %2154 = vset.pattern.permute.xlu0 0
        %2155 = vperm.xlu0 %2154, %v2145
        %v2156 = vpop.permute.xlu0 %2155
        %2159 = vset.pattern.permute.xlu0 0
        %2160 = vperm.xlu0 %2159, %v2146
        %v2161 = vpop.permute.xlu0 %2160
        %2164 = vset.pattern.permute.xlu0 0
        %2165 = vperm.xlu0 %2164, %v2147
        %v2166 = vpop.permute.xlu0 %2165
        %2169 = vset.pattern.permute.xlu0 0
        %2170 = vperm.xlu0 %2169, %v2148
        %v2171 = vpop.permute.xlu0 %2170
        %2174 = vset.pattern.permute.xlu0 0
        %2175 = vperm.xlu0 %2174, %v2149
        %v2176 = vpop.permute.xlu0 %2175
        %2179 = vset.pattern.permute.xlu0 0
        %2180 = vperm.xlu0 %2179, %v2150
        %v2181 = vpop.permute.xlu0 %2180
        %2184 = vset.pattern.permute.xlu0 0
        %2185 = vperm.xlu0 %2184, %v2151
        %v2186 = vpop.permute.xlu0 %2185
        %2189 = vset.pattern.permute.xlu0 0
        %2190 = vperm.xlu0 %2189, %v2152
        %v2191 = vpop.permute.xlu0 %2190
        %v2193 = vmul.f32 %v2129, %v2156
        %v2194 = vmul.f32 %v2130, %v2156
        %v2195 = vmul.f32 %v2131, %v2161
        %v2196 = vmul.f32 %v2132, %v2161
        %v2197 = vmul.f32 %v2133, %v2166
        %v2198 = vmul.f32 %v2134, %v2166
        %v2199 = vmul.f32 %v2135, %v2171
        %v2200 = vmul.f32 %v2136, %v2171
        %v2201 = vmul.f32 %v2137, %v2176
        %v2202 = vmul.f32 %v2138, %v2176
        %v2203 = vmul.f32 %v2139, %v2181
        %v2204 = vmul.f32 %v2140, %v2181
        %v2205 = vmul.f32 %v2141, %v2186
        %v2206 = vmul.f32 %v2142, %v2186
        %v2207 = vmul.f32 %v2143, %v2191
        %v2208 = vmul.f32 %v2144, %v2191
        %v2209 = vld [vmem:[%s8] sm:$0xff]
        %v2210 = vld [vmem:[%s8 + $0x8] sm:$0xff]
        %v2211 = vld [vmem:[%s8 + $0x10] sm:$0xff]
        %v2212 = vld [vmem:[%s8 + $0x18] sm:$0xff]
        %v2213 = vld [vmem:[%s8 + $0x20] sm:$0xff]
        %v2214 = vld [vmem:[%s8 + $0x28] sm:$0xff]
        %v2215 = vld [vmem:[%s8 + $0x30] sm:$0xff]
        %v2216 = vld [vmem:[%s8 + $0x38] sm:$0xff]
        %2218 = vset.pattern.permute.xlu0 0
        %2219 = vperm.xlu0 %2218, %v2209
        %v2220 = vpop.permute.xlu0 %2219
        %2223 = vset.pattern.permute.xlu0 0
        %2224 = vperm.xlu0 %2223, %v2210
        %v2225 = vpop.permute.xlu0 %2224
        %2228 = vset.pattern.permute.xlu0 0
        %2229 = vperm.xlu0 %2228, %v2211
        %v2230 = vpop.permute.xlu0 %2229
        %2233 = vset.pattern.permute.xlu0 0
        %2234 = vperm.xlu0 %2233, %v2212
        %v2235 = vpop.permute.xlu0 %2234
        %2238 = vset.pattern.permute.xlu0 0
        %2239 = vperm.xlu0 %2238, %v2213
        %v2240 = vpop.permute.xlu0 %2239
        %2243 = vset.pattern.permute.xlu0 0
        %2244 = vperm.xlu0 %2243, %v2214
        %v2245 = vpop.permute.xlu0 %2244
        %2248 = vset.pattern.permute.xlu0 0
        %2249 = vperm.xlu0 %2248, %v2215
        %v2250 = vpop.permute.xlu0 %2249
        %2253 = vset.pattern.permute.xlu0 0
        %2254 = vperm.xlu0 %2253, %v2216
        %v2255 = vpop.permute.xlu0 %2254
        %v2257 = vadd.f32 %v2193, %v2220
        %v2258 = vadd.f32 %v2194, %v2220
        %v2259 = vadd.f32 %v2195, %v2225
        %v2260 = vadd.f32 %v2196, %v2225
        %v2261 = vadd.f32 %v2197, %v2230
        %v2262 = vadd.f32 %v2198, %v2230
        %v2263 = vadd.f32 %v2199, %v2235
        %v2264 = vadd.f32 %v2200, %v2235
        %v2265 = vadd.f32 %v2201, %v2240
        %v2266 = vadd.f32 %v2202, %v2240
        %v2267 = vadd.f32 %v2203, %v2245
        %v2268 = vadd.f32 %v2204, %v2245
        %v2269 = vadd.f32 %v2205, %v2250
        %v2270 = vadd.f32 %v2206, %v2250
        %v2271 = vadd.f32 %v2207, %v2255
        %v2272 = vadd.f32 %v2208, %v2255
        %v2273 = vmax.f32 %v2257, 0.0
        %v2274 = vmax.f32 %v2258, 0.0
        %v2275 = vmax.f32 %v2259, 0.0
        %v2276 = vmax.f32 %v2260, 0.0
        %v2277 = vmax.f32 %v2261, 0.0
        %v2278 = vmax.f32 %v2262, 0.0
        %v2279 = vmax.f32 %v2263, 0.0
        %v2280 = vmax.f32 %v2264, 0.0
        %v2281 = vmax.f32 %v2265, 0.0
        %v2282 = vmax.f32 %v2266, 0.0
        %v2283 = vmax.f32 %v2267, 0.0
        %v2284 = vmax.f32 %v2268, 0.0
        %v2285 = vmax.f32 %v2269, 0.0
        %v2286 = vmax.f32 %v2270, 0.0
        %v2287 = vmax.f32 %v2271, 0.0
        %v2288 = vmax.f32 %v2272, 0.0
        %v2289 = vmul.f32 %v2273, %v1485
        %v2290 = vmul.f32 %v2274, %v1489
        %v2291 = vmul.f32 %v2275, %v1485
        %v2292 = vmul.f32 %v2276, %v1489
        %v2293 = vmul.f32 %v2277, %v1485
        %v2294 = vmul.f32 %v2278, %v1489
        %v2295 = vmul.f32 %v2279, %v1485
        %v2296 = vmul.f32 %v2280, %v1489
        %v2297 = vmul.f32 %v2281, %v1485
        %v2298 = vmul.f32 %v2282, %v1489
        %v2299 = vmul.f32 %v2283, %v1485
        %v2300 = vmul.f32 %v2284, %v1489
        %v2301 = vmul.f32 %v2285, %v1485
        %v2302 = vmul.f32 %v2286, %v1489
        %v2303 = vmul.f32 %v2287, %v1485
        %v2304 = vmul.f32 %v2288, %v1489
        %2305 = vst [vmem:[%s423] sm:$0xff] %v2289
        %2306 = vst [vmem:[%s423 + $0x8] sm:$0xff] %v2290
        %2307 = vst [vmem:[%s423 + $0x10] sm:$0xff] %v2291
        %2308 = vst [vmem:[%s423 + $0x18] sm:$0xff] %v2292
        %2309 = vst [vmem:[%s423 + $0x20] sm:$0xff] %v2293
        %2310 = vst [vmem:[%s423 + $0x28] sm:$0xff] %v2294
        %2311 = vst [vmem:[%s423 + $0x30] sm:$0xff] %v2295
        %2312 = vst [vmem:[%s423 + $0x38] sm:$0xff] %v2296
        %2313 = vst [vmem:[%s423 + $0x40] sm:$0xff] %v2297
        %2314 = vst [vmem:[%s423 + $0x48] sm:$0xff] %v2298
        %2315 = vst [vmem:[%s423 + $0x50] sm:$0xff] %v2299
        %2316 = vst [vmem:[%s423 + $0x58] sm:$0xff] %v2300
        %2317 = vst [vmem:[%s423 + $0x60] sm:$0xff] %v2301
        %2318 = vst [vmem:[%s423 + $0x68] sm:$0xff] %v2302
        %2319 = vst [vmem:[%s423 + $0x70] sm:$0xff] %v2303
        %2320 = vst [vmem:[%s423 + $0x78] sm:$0xff] %v2304
        %v2321 = vld [vmem:[%s9] sm:$0xff]
        %v2322 = vld [vmem:[%s9 + $0x8] sm:$0xff]
        %v2323 = vld [vmem:[%s9 + $0x10] sm:$0xff]
        %v2324 = vld [vmem:[%s9 + $0x18] sm:$0xff]
        %v2325 = vld [vmem:[%s9 + $0x20] sm:$0xff]
        %v2326 = vld [vmem:[%s9 + $0x28] sm:$0xff]
        %v2327 = vld [vmem:[%s9 + $0x30] sm:$0xff]
        %v2328 = vld [vmem:[%s9 + $0x38] sm:$0xff]
        %v2329 = vld [vmem:[%s9 + $0x40] sm:$0xff]
        %v2330 = vld [vmem:[%s9 + $0x48] sm:$0xff]
        %v2331 = vld [vmem:[%s9 + $0x50] sm:$0xff]
        %v2332 = vld [vmem:[%s9 + $0x58] sm:$0xff]
        %v2333 = vld [vmem:[%s9 + $0x60] sm:$0xff]
        %v2334 = vld [vmem:[%s9 + $0x68] sm:$0xff]
        %v2335 = vld [vmem:[%s9 + $0x70] sm:$0xff]
        %v2336 = vld [vmem:[%s9 + $0x78] sm:$0xff]
        %v2337 = vmul.f32 %v2289, %v2321
        %v2338 = vmul.f32 %v2290, %v2322
        %v2339 = vmul.f32 %v2291, %v2323
        %v2340 = vmul.f32 %v2292, %v2324
        %v2341 = vmul.f32 %v2293, %v2325
        %v2342 = vmul.f32 %v2294, %v2326
        %v2343 = vmul.f32 %v2295, %v2327
        %v2344 = vmul.f32 %v2296, %v2328
        %v2345 = vmul.f32 %v2297, %v2329
        %v2346 = vmul.f32 %v2298, %v2330
        %v2347 = vmul.f32 %v2299, %v2331
        %v2348 = vmul.f32 %v2300, %v2332
        %v2349 = vmul.f32 %v2301, %v2333
        %v2350 = vmul.f32 %v2302, %v2334
        %v2351 = vmul.f32 %v2303, %v2335
        %v2352 = vmul.f32 %v2304, %v2336
        %2353 = vmatprep.subr.mxu0 0.0
        %2354 = vmatpush1.msra.mxu0 1.0
        %2355 = vmatprep.subr.mxu0 0.0
        %2356 = vmatpush1.msra.mxu0 1.0
        %2357 = vmatprep.subr.mxu0 0.0
        %2358 = vmatpush1.msra.mxu0 1.0
        %2359 = vmatprep.subr.mxu0 0.0
        %2360 = vmatpush1.msra.mxu0 1.0
        %2361 = vmatprep.subr.mxu0 0.0
        %2362 = vmatpush1.msra.mxu0 1.0
        %2363 = vmatprep.subr.mxu0 0.0
        %2364 = vmatpush1.msra.mxu0 1.0
        %2365 = vmatprep.subr.mxu0 0.0
        %2366 = vmatpush1.msra.mxu0 1.0
        %2367 = vmatprep.subr.mxu0 0.0
        %2368 = vmatpush1.msra.mxu0 1.0
        %2369 = vmatprep.subr.mxu0 0.0
        %2370 = vmatpush1.msra.mxu0 1.0
        %2371 = vmatprep.subr.mxu0 0.0
        %2372 = vmatpush1.msra.mxu0 1.0
        %2373 = vmatprep.subr.mxu0 0.0
        %2374 = vmatpush1.msra.mxu0 1.0
        %2375 = vmatprep.subr.mxu0 0.0
        %2376 = vmatpush1.msra.mxu0 1.0
        %2377 = vmatprep.subr.mxu0 0.0
        %2378 = vmatpush1.msra.mxu0 1.0
        %2379 = vmatprep.subr.mxu0 0.0
        %2380 = vmatpush1.msra.mxu0 1.0
        %2381 = vmatprep.subr.mxu0 0.0
        %2382 = vmatpush1.msra.mxu0 1.0
        %2383 = vmatprep.subr.mxu0 0.0
        %2384 = vmatpush1.msra.mxu0 1.0
        %2385 = vmatprep.subr.mxu0 0.0
        %2386 = vmatpush2.msra.mxu0 1.0
        %2387 = vmatprep.subr.mxu0 0.0
        %2388 = vmatpush2.msra.mxu0 1.0
        %2389 = vmatprep.subr.mxu0 0.0
        %2390 = vmatpush2.msra.mxu0 1.0
        %2391 = vmatprep.subr.mxu0 0.0
        %2392 = vmatpush2.msra.mxu0 1.0
        %2393 = vmatprep.subr.mxu0 0.0
        %2394 = vmatpush2.msra.mxu0 1.0
        %2395 = vmatprep.subr.mxu0 0.0
        %2396 = vmatpush2.msra.mxu0 1.0
        %2397 = vmatprep.subr.mxu0 0.0
        %2398 = vmatpush2.msra.mxu0 1.0
        %2399 = vmatprep.subr.mxu0 0.0
        %2400 = vmatpush2.msra.mxu0 1.0
        %2401 = vmatprep.subr.mxu0 0.0
        %2402 = vmatpush2.msra.mxu0 1.0
        %2403 = vmatprep.subr.mxu0 0.0
        %2404 = vmatpush2.msra.mxu0 1.0
        %2405 = vmatprep.subr.mxu0 0.0
        %2406 = vmatpush2.msra.mxu0 1.0
        %2407 = vmatprep.subr.mxu0 0.0
        %2408 = vmatpush2.msra.mxu0 1.0
        %2409 = vmatprep.subr.mxu0 0.0
        %2410 = vmatpush2.msra.mxu0 1.0
        %2411 = vmatprep.subr.mxu0 0.0
        %2412 = vmatpush2.msra.mxu0 1.0
        %2413 = vmatprep.subr.mxu0 0.0
        %2414 = vmatpush2.msra.mxu0 1.0
        %2415 = vmatprep.subr.mxu0 0.0
        %2416 = vmatpush2.msra.mxu0 1.0
        %2417 = vmatprep.mubr.f32.mxu0 %v2338
        %2418 = vmatmul.mubr.f32.gmra.mxu0 %v2337
        %v2419 = vpop.f32.mrf.mxu0
        %v2420 = vadd.f32 0.0, %v2419
        %v2421 = vpop.f32.mrf.mxu0
        %2422 = vmatprep.mubr.f32.mxu0 %v2340
        %2423 = vmatmul.mubr.f32.gmra.mxu0 %v2339
        %v2424 = vpop.f32.mrf.mxu0
        %v2425 = vadd.f32 0.0, %v2424
        %v2426 = vpop.f32.mrf.mxu0
        %2427 = vmatprep.mubr.f32.mxu0 %v2342
        %2428 = vmatmul.mubr.f32.gmra.mxu0 %v2341
        %v2429 = vpop.f32.mrf.mxu0
        %v2430 = vadd.f32 0.0, %v2429
        %v2431 = vpop.f32.mrf.mxu0
        %2432 = vmatprep.mubr.f32.mxu0 %v2344
        %2433 = vmatmul.mubr.f32.gmra.mxu0 %v2343
        %v2434 = vpop.f32.mrf.mxu0
        %v2435 = vadd.f32 0.0, %v2434
        %v2436 = vpop.f32.mrf.mxu0
        %2437 = vmatprep.mubr.f32.mxu0 %v2346
        %2438 = vmatmul.mubr.f32.gmra.mxu0 %v2345
        %v2439 = vpop.f32.mrf.mxu0
        %v2440 = vadd.f32 0.0, %v2439
        %v2441 = vpop.f32.mrf.mxu0
        %2442 = vmatprep.mubr.f32.mxu0 %v2348
        %2443 = vmatmul.mubr.f32.gmra.mxu0 %v2347
        %v2444 = vpop.f32.mrf.mxu0
        %v2445 = vadd.f32 0.0, %v2444
        %v2446 = vpop.f32.mrf.mxu0
        %2447 = vmatprep.mubr.f32.mxu0 %v2350
        %2448 = vmatmul.mubr.f32.gmra.mxu0 %v2349
        %v2449 = vpop.f32.mrf.mxu0
        %v2450 = vadd.f32 0.0, %v2449
        %v2451 = vpop.f32.mrf.mxu0
        %2452 = vmatprep.mubr.f32.mxu0 %v2352
        %2453 = vmatmul.mubr.f32.gmra.mxu0 %v2351
        %v2454 = vpop.f32.mrf.mxu0
        %v2455 = vadd.f32 0.0, %v2454
        %v2456 = vpop.f32.mrf.mxu0
        %2457 = vdwg.mxu0
        %vm2458 = vcmask 7168
        %v2459 = vsel %vm2458, %v2420, 0.0
        %v2460 = vsel %vm2458, %v2425, 0.0
        %v2461 = vadd.f32 %v2459, %v2460
        %v2462 = vsel %vm2458, %v2430, 0.0
        %v2463 = vadd.f32 %v2461, %v2462
        %v2464 = vsel %vm2458, %v2435, 0.0
        %v2465 = vadd.f32 %v2463, %v2464
        %v2466 = vsel %vm2458, %v2440, 0.0
        %v2467 = vadd.f32 %v2465, %v2466
        %v2468 = vsel %vm2458, %v2445, 0.0
        %v2469 = vadd.f32 %v2467, %v2468
        %v2470 = vsel %vm2458, %v2450, 0.0
        %v2471 = vadd.f32 %v2469, %v2470
        %v2472 = vsel %vm2458, %v2455, 0.0
        %v2473 = vadd.f32 %v2471, %v2472
        %2474 = vadd.xlane.f32.xlu0 %v2473
        %v2475 = vpop.xlane.xlu0 %2474
        %v2476 = vrot.slane %v2475, 4
        %v2477 = vadd.f32 %v2475, %v2476
        %v2478 = vrot.slane %v2477, 2
        %v2479 = vadd.f32 %v2477, %v2478
        %v2480 = vrot.slane %v2479, 1
        %v2481 = vadd.f32 %v2479, %v2480
        %s2482 = vtos %v2481
        %s2483 = scalar_lea.vmem %s9, 128
        %v2484 = vld [vmem:[%s2483] sm:$0xff]
        %v2485 = vld [vmem:[%s2483 + $0x8] sm:$0xff]
        %v2486 = vld [vmem:[%s2483 + $0x10] sm:$0xff]
        %v2487 = vld [vmem:[%s2483 + $0x18] sm:$0xff]
        %v2488 = vld [vmem:[%s2483 + $0x20] sm:$0xff]
        %v2489 = vld [vmem:[%s2483 + $0x28] sm:$0xff]
        %v2490 = vld [vmem:[%s2483 + $0x30] sm:$0xff]
        %v2491 = vld [vmem:[%s2483 + $0x38] sm:$0xff]
        %v2492 = vld [vmem:[%s2483 + $0x40] sm:$0xff]
        %v2493 = vld [vmem:[%s2483 + $0x48] sm:$0xff]
        %v2494 = vld [vmem:[%s2483 + $0x50] sm:$0xff]
        %v2495 = vld [vmem:[%s2483 + $0x58] sm:$0xff]
        %v2496 = vld [vmem:[%s2483 + $0x60] sm:$0xff]
        %v2497 = vld [vmem:[%s2483 + $0x68] sm:$0xff]
        %v2498 = vld [vmem:[%s2483 + $0x70] sm:$0xff]
        %v2499 = vld [vmem:[%s2483 + $0x78] sm:$0xff]
        %v2500 = vmul.f32 %v2289, %v2484
        %v2501 = vmul.f32 %v2290, %v2485
        %v2502 = vmul.f32 %v2291, %v2486
        %v2503 = vmul.f32 %v2292, %v2487
        %v2504 = vmul.f32 %v2293, %v2488
        %v2505 = vmul.f32 %v2294, %v2489
        %v2506 = vmul.f32 %v2295, %v2490
        %v2507 = vmul.f32 %v2296, %v2491
        %v2508 = vmul.f32 %v2297, %v2492
        %v2509 = vmul.f32 %v2298, %v2493
        %v2510 = vmul.f32 %v2299, %v2494
        %v2511 = vmul.f32 %v2300, %v2495
        %v2512 = vmul.f32 %v2301, %v2496
        %v2513 = vmul.f32 %v2302, %v2497
        %v2514 = vmul.f32 %v2303, %v2498
        %v2515 = vmul.f32 %v2304, %v2499
        %2516 = vmatprep.subr.mxu0 0.0
        %2517 = vmatpush1.msra.mxu0 1.0
        %2518 = vmatprep.subr.mxu0 0.0
        %2519 = vmatpush1.msra.mxu0 1.0
        %2520 = vmatprep.subr.mxu0 0.0
        %2521 = vmatpush1.msra.mxu0 1.0
        %2522 = vmatprep.subr.mxu0 0.0
        %2523 = vmatpush1.msra.mxu0 1.0
        %2524 = vmatprep.subr.mxu0 0.0
        %2525 = vmatpush1.msra.mxu0 1.0
        %2526 = vmatprep.subr.mxu0 0.0
        %2527 = vmatpush1.msra.mxu0 1.0
        %2528 = vmatprep.subr.mxu0 0.0
        %2529 = vmatpush1.msra.mxu0 1.0
        %2530 = vmatprep.subr.mxu0 0.0
        %2531 = vmatpush1.msra.mxu0 1.0
        %2532 = vmatprep.subr.mxu0 0.0
        %2533 = vmatpush1.msra.mxu0 1.0
        %2534 = vmatprep.subr.mxu0 0.0
        %2535 = vmatpush1.msra.mxu0 1.0
        %2536 = vmatprep.subr.mxu0 0.0
        %2537 = vmatpush1.msra.mxu0 1.0
        %2538 = vmatprep.subr.mxu0 0.0
        %2539 = vmatpush1.msra.mxu0 1.0
        %2540 = vmatprep.subr.mxu0 0.0
        %2541 = vmatpush1.msra.mxu0 1.0
        %2542 = vmatprep.subr.mxu0 0.0
        %2543 = vmatpush1.msra.mxu0 1.0
        %2544 = vmatprep.subr.mxu0 0.0
        %2545 = vmatpush1.msra.mxu0 1.0
        %2546 = vmatprep.subr.mxu0 0.0
        %2547 = vmatpush1.msra.mxu0 1.0
        %2548 = vmatprep.subr.mxu0 0.0
        %2549 = vmatpush2.msra.mxu0 1.0
        %2550 = vmatprep.subr.mxu0 0.0
        %2551 = vmatpush2.msra.mxu0 1.0
        %2552 = vmatprep.subr.mxu0 0.0
        %2553 = vmatpush2.msra.mxu0 1.0
        %2554 = vmatprep.subr.mxu0 0.0
        %2555 = vmatpush2.msra.mxu0 1.0
        %2556 = vmatprep.subr.mxu0 0.0
        %2557 = vmatpush2.msra.mxu0 1.0
        %2558 = vmatprep.subr.mxu0 0.0
        %2559 = vmatpush2.msra.mxu0 1.0
        %2560 = vmatprep.subr.mxu0 0.0
        %2561 = vmatpush2.msra.mxu0 1.0
        %2562 = vmatprep.subr.mxu0 0.0
        %2563 = vmatpush2.msra.mxu0 1.0
        %2564 = vmatprep.subr.mxu0 0.0
        %2565 = vmatpush2.msra.mxu0 1.0
        %2566 = vmatprep.subr.mxu0 0.0
        %2567 = vmatpush2.msra.mxu0 1.0
        %2568 = vmatprep.subr.mxu0 0.0
        %2569 = vmatpush2.msra.mxu0 1.0
        %2570 = vmatprep.subr.mxu0 0.0
        %2571 = vmatpush2.msra.mxu0 1.0
        %2572 = vmatprep.subr.mxu0 0.0
        %2573 = vmatpush2.msra.mxu0 1.0
        %2574 = vmatprep.subr.mxu0 0.0
        %2575 = vmatpush2.msra.mxu0 1.0
        %2576 = vmatprep.subr.mxu0 0.0
        %2577 = vmatpush2.msra.mxu0 1.0
        %2578 = vmatprep.subr.mxu0 0.0
        %2579 = vmatpush2.msra.mxu0 1.0
        %2580 = vmatprep.mubr.f32.mxu0 %v2501
        %2581 = vmatmul.mubr.f32.gmra.mxu0 %v2500
        %v2582 = vpop.f32.mrf.mxu0
        %v2583 = vadd.f32 0.0, %v2582
        %v2584 = vpop.f32.mrf.mxu0
        %2585 = vmatprep.mubr.f32.mxu0 %v2503
        %2586 = vmatmul.mubr.f32.gmra.mxu0 %v2502
        %v2587 = vpop.f32.mrf.mxu0
        %v2588 = vadd.f32 0.0, %v2587
        %v2589 = vpop.f32.mrf.mxu0
        %2590 = vmatprep.mubr.f32.mxu0 %v2505
        %2591 = vmatmul.mubr.f32.gmra.mxu0 %v2504
        %v2592 = vpop.f32.mrf.mxu0
        %v2593 = vadd.f32 0.0, %v2592
        %v2594 = vpop.f32.mrf.mxu0
        %2595 = vmatprep.mubr.f32.mxu0 %v2507
        %2596 = vmatmul.mubr.f32.gmra.mxu0 %v2506
        %v2597 = vpop.f32.mrf.mxu0
        %v2598 = vadd.f32 0.0, %v2597
        %v2599 = vpop.f32.mrf.mxu0
        %2600 = vmatprep.mubr.f32.mxu0 %v2509
        %2601 = vmatmul.mubr.f32.gmra.mxu0 %v2508
        %v2602 = vpop.f32.mrf.mxu0
        %v2603 = vadd.f32 0.0, %v2602
        %v2604 = vpop.f32.mrf.mxu0
        %2605 = vmatprep.mubr.f32.mxu0 %v2511
        %2606 = vmatmul.mubr.f32.gmra.mxu0 %v2510
        %v2607 = vpop.f32.mrf.mxu0
        %v2608 = vadd.f32 0.0, %v2607
        %v2609 = vpop.f32.mrf.mxu0
        %2610 = vmatprep.mubr.f32.mxu0 %v2513
        %2611 = vmatmul.mubr.f32.gmra.mxu0 %v2512
        %v2612 = vpop.f32.mrf.mxu0
        %v2613 = vadd.f32 0.0, %v2612
        %v2614 = vpop.f32.mrf.mxu0
        %2615 = vmatprep.mubr.f32.mxu0 %v2515
        %2616 = vmatmul.mubr.f32.gmra.mxu0 %v2514
        %v2617 = vpop.f32.mrf.mxu0
        %v2618 = vadd.f32 0.0, %v2617
        %v2619 = vpop.f32.mrf.mxu0
        %2620 = vdwg.mxu0
        %v2621 = vsel %vm2458, %v2583, 0.0
        %v2622 = vsel %vm2458, %v2588, 0.0
        %v2623 = vadd.f32 %v2621, %v2622
        %v2624 = vsel %vm2458, %v2593, 0.0
        %v2625 = vadd.f32 %v2623, %v2624
        %v2626 = vsel %vm2458, %v2598, 0.0
        %v2627 = vadd.f32 %v2625, %v2626
        %v2628 = vsel %vm2458, %v2603, 0.0
        %v2629 = vadd.f32 %v2627, %v2628
        %v2630 = vsel %vm2458, %v2608, 0.0
        %v2631 = vadd.f32 %v2629, %v2630
        %v2632 = vsel %vm2458, %v2613, 0.0
        %v2633 = vadd.f32 %v2631, %v2632
        %v2634 = vsel %vm2458, %v2618, 0.0
        %v2635 = vadd.f32 %v2633, %v2634
        %2636 = vadd.xlane.f32.xlu0 %v2635
        %v2637 = vpop.xlane.xlu0 %2636
        %v2638 = vrot.slane %v2637, 4
        %v2639 = vadd.f32 %v2637, %v2638
        %v2640 = vrot.slane %v2639, 2
        %v2641 = vadd.f32 %v2639, %v2640
        %v2642 = vrot.slane %v2641, 1
        %v2643 = vadd.f32 %v2641, %v2642
        %s2644 = vtos %v2643
        %vm2645 = vcmp.eq.s32.totalorder %v726, 0
        %v2646 = vstv %s2482
        %v2647 = vstv %s2644
        %v2648 = vsel %vm2645, %v2646, %v2647
        %v2649 = vld [vmem:[%s10] sm:$0x1]
        %v2650 = vadd.f32 %v2648, %v2649
        %vm2651 = vcmask 8192
        %2652 = vst.msk [vmem:[%s413] sm:$0x1] %vm2651, %v2650
        %p2653 = scmp.lt.s32.totalorder %s27, 1
        %s2654 = scalar_select %p2653, %s27, 1
        %s2655 = smul.addr %s2654, 16
        %s2656 = smul.addr %s2655, 8
        %s2657 = scalar_lea.vmem %s11, %s2656
        %s2658 = sand.u32 %s297, 1
        %s2659 = scalar_lea.sflag [#allocation3], %s2658
        %s2660 = sand.u32 %s297, 1
        %s2661 = scalar_lea.vmem [#allocation2], %s2660
        // Predicated region
        $region65: #{model_forward.1} parent=63 // pred_check
          %p2662 = pneg %p281
        $region66: #{model_forward.1} parent=63 // pred_check_branch
          %2664 = sbr.rel (%p2662) target = $region68
        $region67: #{model_forward.1} parent=63 // pred_region
          _
        $region68: #{model_forward.1} parent=63 // pred_fallthru
          _
        // Predicated region
        $region69: #{model_forward.1} parent=63 // pred_check
          %p2665 = pneg %p307
        $region70: #{model_forward.1} parent=63 // pred_check_branch
          %2667 = sbr.rel (%p2665) target = $region72
        $region71: #{model_forward.1} parent=63 // pred_region
          %s2669 = ssub.s32 16, 16
          %2670 = vsyncadd %s2659, %s2669
          %s2671 = smul.addr %s27, 16
          %s2672 = scalar_lea.hbm %s12, %s2671
          %s2674 = sshll.u32 %s2661, 4
          %s2675 = int_to_ptr.vmem [resolvable:$true] %s2674
          %2677 = dma.vmem_to_hbm [thread:$0]  %s2675, 16, %s2672, %s2659
        $region72: #{model_forward.1} parent=63 // pred_fallthru
          _
      $region64: #{model_forward.1} parent=5 // pred_fallthru
        _
      %p2678 = scmp.le.s32.totalorder 2, %s22
      // Predicated region
      $region73: #{model_forward.1} parent=5 // pred_check
        %p2679 = pneg %p2678
      $region74: #{model_forward.1} parent=5 // pred_check_branch
        %2681 = sbr.rel (%p2679) target = $region76
      $region75: #{model_forward.1} parent=5 // pred_region
        %s2682 = ssub.s32 %s22, 2
        // Predicated region
        $region77: #{model_forward.1} parent=75 // pred_check
          %p2683 = pneg %p287
        $region78: #{model_forward.1} parent=75 // pred_check_branch
          %2685 = sbr.rel (%p2683) target = $region80
        $region79: #{model_forward.1} parent=75 // pred_region
          %p2686 = scmp.lt.s32.totalorder %s28, 1
          %s2687 = scalar_select %p2686, %s28, 1
          %s2688 = smul.addr %s2687, 16
          %s2689 = smul.addr %s2688, 8
          %s2690 = scalar_lea.vmem %s11, %s2689
        $region80: #{model_forward.1} parent=75 // pred_fallthru
          _
        // Predicated region
        $region81: #{model_forward.1} parent=75 // pred_check
          %p2691 = pneg %p313
        $region82: #{model_forward.1} parent=75 // pred_check_branch
          %2693 = sbr.rel (%p2691) target = $region84
        $region83: #{model_forward.1} parent=75 // pred_region
          %s2694 = sand.u32 %s298, 1
          %s2695 = scalar_lea.sflag [#allocation3], %s2694
          %s2696 = sand.u32 %s298, 1
          %s2697 = scalar_lea.vmem [#allocation2], %s2696
          %2698 = dma.done %s2695, 16
        $region84: #{model_forward.1} parent=75 // pred_fallthru
          _
      $region76: #{model_forward.1} parent=5 // pred_fallthru
        _
    $region6: #{model_forward.1} parent=1 // loop_footer
      %s26 = sadd.s32 1, %s22
    $region7: #{model_forward.1} parent=1 // loop_footer_branch
      %21 = sbr.rel target = $region3
    $region8: #{model_forward.1} parent=1 // loop_exit
      _
    %2699 = vsyncpa [#allocation3], 1
    %s2700 = scalar_lea.sflag [#allocation3], 1
    %2701 = vsyncpa %s2700, 1

</llo_original>
